<compile_context>
chip_gen: v5e
topology: v5e:2x2
jax: 0.10.0
libtpu: 0.0.40
codegen_flags: <defaults>
</compile_context>

<pallas_src>
import math
import functools

import jax
import jax.numpy as jnp
from jax.experimental import pallas as pl
from jax.experimental.pallas import tpu as pltpu


# ----------------------------- in-kernel helpers ---------------------------------

def _layernorm(x, g, b, eps=1e-5):
    # x: (S, D) f32, g/b: (1, D) f32 -> (S, D) f32 (stats in f32)
    mu = jnp.mean(x, axis=-1, keepdims=True)
    xc = x - mu
    var = jnp.mean(xc * xc, axis=-1, keepdims=True)
    return xc * jax.lax.rsqrt(var + eps) * g + b


# ----------------------------- fused transformer kernel ---------------------------

def transformer_kernel(resid_ref,
                       aln_g_ref, aln_b_ref, wqkv_ref, bqkv_ref, wo_ref, bo_ref,
                       mln_g_ref, mln_b_ref, wup_ref, bup_ref, wdn_ref, bdn_ref,
                       fln_g_ref, fln_b_ref, wu_ref, bu_ref,
                       out_ref,
                       qkv_sc, ctx_sc,
                       *, n_layer, n_head, d_head):
    bf16 = jnp.bfloat16
    x = resid_ref[...]                                    # (S, D) f32 (one batch element)
    S, D = x.shape

    # Causal additive bias built in-kernel (0 where key <= query, else -1e30). No HBM mask.
    row = jax.lax.broadcasted_iota(jnp.int32, (S, S), 0)
    col = jax.lax.broadcasted_iota(jnp.int32, (S, S), 1)
    causal_bias = jnp.where(col <= row, 0.0, -1e30).astype(jnp.float32)      # (S, S)

    # n_layer is tiny here -> fully unrolled python loop (all weights VMEM-resident).
    for l in range(n_layer):
        # ---------- attention block (pre-LN, causal MHA, fused projections) ----------
        h = _layernorm(x, aln_g_ref[l], aln_b_ref[l]).astype(bf16)           # (S, D) bf16
        # One dense QKV matmul (softmax scale folded into the Q weights at init).
        qkv_sc[...] = jnp.dot(h, wqkv_ref[l],
                              preferred_element_type=jnp.float32) + bqkv_ref[l]   # (S, 3D)

        # Per-head attention core (inherently H small (S,S) blocks at d_head=8);
        # contexts are written lane-contiguously into ctx_sc so the output projection
        # is a single dense matmul.
        for hh in range(n_head):
            o = hh * d_head
            qh = qkv_sc[:, o:o + d_head].astype(bf16)                        # (S, dh)
            kh = qkv_sc[:, D + o:D + o + d_head].astype(bf16)                # (S, dh)
            vh = qkv_sc[:, 2 * D + o:2 * D + o + d_head].astype(bf16)        # (S, dh)

            s = jnp.dot(qh, kh.T, preferred_element_type=jnp.float32) + causal_bias
            s = s - jnp.max(s, axis=-1, keepdims=True)
            p = jnp.exp(s)
            p = p * pl.reciprocal(jnp.sum(p, axis=-1, keepdims=True), approx=True)

            ctx_sc[:, o:o + d_head] = jnp.dot(p.astype(bf16), vh,
                                              preferred_element_type=jnp.float32)

        # Single dense output projection over the merged (S, H*dh) context slab.
        x = x + jnp.dot(ctx_sc[...].astype(bf16), wo_ref[l],
                        preferred_element_type=jnp.float32) + bo_ref[l]

        # ---------- MLP block (pre-LN, up -> ReLU -> down) ----------
        h2 = _layernorm(x, mln_g_ref[l], mln_b_ref[l]).astype(bf16)
        up = jnp.maximum(jnp.dot(h2, wup_ref[l],
                                 preferred_element_type=jnp.float32) + bup_ref[l], 0.0)
        x = x + jnp.dot(up.astype(bf16), wdn_ref[l],
                        preferred_element_type=jnp.float32) + bdn_ref[l]

    # ---------- final LN + unembedding (lane-dense padded vocab) ----------
    hf = _layernorm(x, fln_g_ref[...], fln_b_ref[...]).astype(bf16)
    out_ref[...] = jnp.dot(hf, wu_ref[...],
                           preferred_element_type=jnp.float32) + bu_ref[...]


# ----------------------------- wrapper ---------------------------------------------

def _const_spec(arr):
    # Same full block at every grid step (weights stay resident in VMEM).
    nd = arr.ndim
    return pl.BlockSpec(arr.shape, lambda b: (0,) * nd)


def run_transformer(resid, params, *, n_layer, n_head, d_head, n_vocab_pad):
    B, S, D = resid.shape
    d_mlp = 4 * D
    kernel = functools.partial(transformer_kernel,
                               n_layer=n_layer, n_head=n_head, d_head=d_head)
    args = (resid,) + tuple(params)

    in_specs = [pl.BlockSpec((None, S, D), lambda b: (b, 0, 0))] + \
               [_const_spec(p) for p in params]
    out_specs = pl.BlockSpec((None, S, n_vocab_pad), lambda b: (b, 0, 0))

    # Advisory cost estimate for the XLA scheduler.
    flops_layer = (2 * S * D * (3 * D)          # fused QKV
                   + 4 * S * S * D              # scores + context over all heads
                   + 2 * S * D * D              # output projection
                   + 4 * S * D * d_mlp)         # MLP up + down
    flops = B * (n_layer * flops_layer + 2 * S * D * n_vocab_pad)
    transcendentals = B * n_layer * n_head * S * S          # exp in softmax
    bytes_accessed = int(sum(a.size * a.dtype.itemsize for a in args)
                         + B * S * n_vocab_pad * 4)
    cost = pl.CostEstimate(flops=flops, transcendentals=transcendentals,
                           bytes_accessed=bytes_accessed)

    return pl.pallas_call(
        kernel,
        out_shape=jax.ShapeDtypeStruct((B, S, n_vocab_pad), jnp.float32),
        grid=(B,),
        in_specs=in_specs,
        out_specs=out_specs,
        scratch_shapes=[pltpu.VMEM((S, 3 * D), jnp.float32),   # fused qkv slab
                        pltpu.VMEM((S, D), jnp.float32)],      # merged-head context slab
        compiler_params=pltpu.CompilerParams(
            dimension_semantics=("parallel",),                 # v7x: shard batch over 2 TCs
            vmem_limit_bytes=32 * 1024 * 1024),
        cost_estimate=cost,
    )(*args)


# ----------------------------- model setup -----------------------------------------

def make_sinusoidal_pe(max_n_ctx, d_model):
    pos = jnp.arange(max_n_ctx, dtype=jnp.float32)[:, None]
    div = jnp.exp(jnp.arange(0, d_model, 2, dtype=jnp.float32)
                  * (-math.log(10000.0) / d_model))
    pe = jnp.zeros((max_n_ctx, d_model), dtype=jnp.float32)
    pe = pe.at[:, 0::2].set(jnp.sin(pos * div))
    pe = pe.at[:, 1::2].set(jnp.cos(pos * div))
    return pe


def init_params(key, *, n_vocab, n_layer, d_model, d_head, n_vocab_pad,
                initializer_range=0.02):
    d_mlp = 4 * d_model
    std = initializer_range / math.sqrt(n_layer)
    scale = 1.0 / math.sqrt(d_head)                 # folded into the Q weights/bias
    keys = jax.random.split(key, 2 + 4 * n_layer)

    embedding = initializer_range * math.sqrt(d_model) * jax.random.normal(
        keys[0], (n_vocab, d_model), jnp.float32)

    aln_g, aln_b, mln_g, mln_b = [], [], [], []
    wqkv, bqkv, wo, bo = [], [], [], []
    wup, bup, wdn, bdn = [], [], [], []

    for l in range(n_layer):
        k0, k1, k2, k3 = keys[2 + 4 * l: 2 + 4 * (l + 1)]
        w_in = std * jax.random.normal(k0, (3 * d_model, d_model), jnp.float32)   # [out, in]
        w_out = std * jax.random.normal(k1, (d_model, d_model), jnp.float32)      # [out, in]
        w_up = std * jax.random.normal(k2, (d_mlp, d_model), jnp.float32)         # [out, in]
        w_dn = std * jax.random.normal(k3, (d_model, d_mlp), jnp.float32)         # [out, in]

        # Pack fused QKV as [in, 3*out] on the host; fold softmax scale into the Q block.
        wq_t = w_in[:d_model].T * scale
        wk_t = w_in[d_model:2 * d_model].T
        wv_t = w_in[2 * d_model:].T
        wqkv.append(jnp.concatenate([wq_t, wk_t, wv_t], axis=1))        # (D, 3D)
        bqkv.append(jnp.zeros((1, 3 * d_model), jnp.float32))           # in_proj_bias = 0
        wo.append(w_out.T)                                              # (H*dh, D) = [in, out]
        bo.append(jnp.zeros((1, d_model), jnp.float32))
        aln_g.append(jnp.ones((1, d_model), jnp.float32))
        aln_b.append(jnp.zeros((1, d_model), jnp.float32))
        mln_g.append(jnp.ones((1, d_model), jnp.float32))
        mln_b.append(jnp.zeros((1, d_model), jnp.float32))
        wup.append(w_up.T)                                              # (D, d_mlp)
        bup.append(jnp.zeros((1, d_mlp), jnp.float32))
        wdn.append(w_dn.T)                                              # (d_mlp, D)
        bdn.append(jnp.zeros((1, d_model), jnp.float32))

    bf16 = jnp.bfloat16
    stack = lambda xs, dt=jnp.float32: jnp.stack(xs).astype(dt)

    layer_params = (
        stack(aln_g), stack(aln_b),
        stack(wqkv, bf16), stack(bqkv),
        stack(wo, bf16), stack(bo),
        stack(mln_g), stack(mln_b),
        stack(wup, bf16), stack(bup),
        stack(wdn, bf16), stack(bdn),
    )

    # Final LN + unembed, zero-padded to a lane-dense (multiple-of-128) vocab axis.
    w_u = initializer_range * jax.random.normal(keys[1], (n_vocab, d_model), jnp.float32)
    wu_t = jnp.zeros((d_model, n_vocab_pad), jnp.float32).at[:, :n_vocab].set(w_u.T)
    final_params = (
        jnp.ones((1, d_model), jnp.float32),
        jnp.zeros((1, d_model), jnp.float32),
        wu_t.astype(bf16),
        jnp.zeros((1, n_vocab_pad), jnp.float32),
    )
    return embedding, layer_params + final_params


def transformer_forward(tokens, embedding, pe, params, *,
                        n_layer, n_head, d_head, n_vocab, n_vocab_pad):
    B, S = tokens.shape
    resid = jnp.take(embedding, tokens, axis=0) + pe[:S][None, :, :]   # glue: gather + PE
    logits_pad = run_transformer(resid, params,
                                 n_layer=n_layer, n_head=n_head, d_head=d_head,
                                 n_vocab_pad=n_vocab_pad)
    return logits_pad[:, :, :n_vocab]


# ----------------------------- main -------------------------------------------------

if __name__ == "__main__":
    # Config (small, consistent with the module): d_model=32, d_head=8 -> n_head=4, d_mlp=128
    n_vocab = 64
    n_layer = 2
    d_model = 32
    d_head = 8
    n_head = d_model // d_head
    n_ctx = 64
    batch = 2
    seq = 8
    n_vocab_pad = ((n_vocab + 127) // 128) * 128   # lane-dense logits store

    key = jax.random.PRNGKey(0)
    k_tok, k_par = jax.random.split(key)

    embedding, params = init_params(
        k_par, n_vocab=n_vocab, n_layer=n_layer, d_model=d_model,
        d_head=d_head, n_vocab_pad=n_vocab_pad)
    pe = make_sinusoidal_pe(n_ctx, d_model)

    tokens = jax.random.randint(k_tok, (batch, seq), 0, n_vocab, dtype=jnp.int32)

    fwd = jax.jit(functools.partial(
        transformer_forward, n_layer=n_layer, n_head=n_head, d_head=d_head,
        n_vocab=n_vocab, n_vocab_pad=n_vocab_pad))
    logits = fwd(tokens, embedding, pe, params)
    logits = jax.block_until_ready(logits)

    assert logits.shape == (batch, seq, n_vocab)
    assert bool(jnp.all(jnp.isfinite(logits)))
    print("KERNEL_OK")
</pallas_src>

<mosaic_0001>
module attributes {stable_mosaic.version = 11 : i64} {
  func.func @transformer_kernel(%arg0: i32, %arg1: memref<1x8x32xf32, #tpu.memory_space<vmem>>, %arg2: memref<2x1x32xf32, #tpu.memory_space<vmem>>, %arg3: memref<2x1x32xf32, #tpu.memory_space<vmem>>, %arg4: memref<2x32x96xbf16, #tpu.memory_space<vmem>>, %arg5: memref<2x1x96xf32, #tpu.memory_space<vmem>>, %arg6: memref<2x32x32xbf16, #tpu.memory_space<vmem>>, %arg7: memref<2x1x32xf32, #tpu.memory_space<vmem>>, %arg8: memref<2x1x32xf32, #tpu.memory_space<vmem>>, %arg9: memref<2x1x32xf32, #tpu.memory_space<vmem>>, %arg10: memref<2x32x128xbf16, #tpu.memory_space<vmem>>, %arg11: memref<2x1x128xf32, #tpu.memory_space<vmem>>, %arg12: memref<2x128x32xbf16, #tpu.memory_space<vmem>>, %arg13: memref<2x1x32xf32, #tpu.memory_space<vmem>>, %arg14: memref<1x32xf32, #tpu.memory_space<vmem>>, %arg15: memref<1x32xf32, #tpu.memory_space<vmem>>, %arg16: memref<32x128xbf16, #tpu.memory_space<vmem>>, %arg17: memref<1x128xf32, #tpu.memory_space<vmem>>, %arg18: memref<1x8x128xf32, #tpu.memory_space<vmem>>, %arg19: memref<8x96xf32, #tpu.memory_space<vmem>>, %arg20: memref<8x32xf32, #tpu.memory_space<vmem>>) attributes {dimension_semantics = [#tpu.dimension_semantics<parallel>], iteration_bounds = array<i64: 2>, scalar_prefetch = 0 : i64, scratch_operands = 2 : i64, tpu.core_type = #tpu.core_type<tc>, window_params = [{transform_indices = @transform_0, window_bounds = array<i64: 1, 8, 32>}, {pipeline_mode = #tpu.pipeline_mode<synchronous>, transform_indices = @transform_1, window_bounds = array<i64: 2, 1, 32>}, {pipeline_mode = #tpu.pipeline_mode<synchronous>, transform_indices = @transform_2, window_bounds = array<i64: 2, 1, 32>}, {pipeline_mode = #tpu.pipeline_mode<synchronous>, transform_indices = @transform_3, window_bounds = array<i64: 2, 32, 96>}, {pipeline_mode = #tpu.pipeline_mode<synchronous>, transform_indices = @transform_4, window_bounds = array<i64: 2, 1, 96>}, {pipeline_mode = #tpu.pipeline_mode<synchronous>, transform_indices = @transform_5, window_bounds = array<i64: 2, 32, 32>}, {pipeline_mode = #tpu.pipeline_mode<synchronous>, transform_indices = @transform_6, window_bounds = array<i64: 2, 1, 32>}, {pipeline_mode = #tpu.pipeline_mode<synchronous>, transform_indices = @transform_7, window_bounds = array<i64: 2, 1, 32>}, {pipeline_mode = #tpu.pipeline_mode<synchronous>, transform_indices = @transform_8, window_bounds = array<i64: 2, 1, 32>}, {pipeline_mode = #tpu.pipeline_mode<synchronous>, transform_indices = @transform_9, window_bounds = array<i64: 2, 32, 128>}, {pipeline_mode = #tpu.pipeline_mode<synchronous>, transform_indices = @transform_10, window_bounds = array<i64: 2, 1, 128>}, {pipeline_mode = #tpu.pipeline_mode<synchronous>, transform_indices = @transform_11, window_bounds = array<i64: 2, 128, 32>}, {pipeline_mode = #tpu.pipeline_mode<synchronous>, transform_indices = @transform_12, window_bounds = array<i64: 2, 1, 32>}, {pipeline_mode = #tpu.pipeline_mode<synchronous>, transform_indices = @transform_13, window_bounds = array<i64: 1, 32>}, {pipeline_mode = #tpu.pipeline_mode<synchronous>, transform_indices = @transform_14, window_bounds = array<i64: 1, 32>}, {pipeline_mode = #tpu.pipeline_mode<synchronous>, transform_indices = @transform_15, window_bounds = array<i64: 32, 128>}, {pipeline_mode = #tpu.pipeline_mode<synchronous>, transform_indices = @transform_16, window_bounds = array<i64: 1, 128>}, {transform_indices = @transform_17, window_bounds = array<i64: 1, 8, 128>}]} {
    %c0 = arith.constant 0 : index
    %c0_0 = arith.constant 0 : index
    %c0_1 = arith.constant 0 : index
    %0 = vector.load %arg1[%c0, %c0_0, %c0_1] : memref<1x8x32xf32, #tpu.memory_space<vmem>>, vector<1x8x32xf32>
    %1 = vector.shape_cast %0 : vector<1x8x32xf32> to vector<8x32xf32>
    %2 = tpu.iota {dimensions = array<i32: 0>} : vector<8x8xi32>
    %3 = tpu.iota {dimensions = array<i32: 1>} : vector<8x8xi32>
    %4 = arith.cmpi sle, %3, %2 : vector<8x8xi32>
    %cst = arith.constant 0.000000e+00 : f32
    %cst_2 = arith.constant -1.000000e+30 : f32
    %5 = vector.broadcast %cst : f32 to vector<8x8xf32>
    %6 = vector.broadcast %cst_2 : f32 to vector<8x8xf32>
    %7 = arith.select %4, %5, %6 : vector<8x8xi1>, vector<8x8xf32>
    %c0_3 = arith.constant 0 : index
    %c0_4 = arith.constant 0 : index
    %c0_5 = arith.constant 0 : index
    %8 = vector.load %arg2[%c0_3, %c0_4, %c0_5] : memref<2x1x32xf32, #tpu.memory_space<vmem>>, vector<1x1x32xf32>
    %9 = vector.shape_cast %8 : vector<1x1x32xf32> to vector<1x32xf32>
    %c0_6 = arith.constant 0 : index
    %c0_7 = arith.constant 0 : index
    %c0_8 = arith.constant 0 : index
    %10 = vector.load %arg3[%c0_6, %c0_7, %c0_8] : memref<2x1x32xf32, #tpu.memory_space<vmem>>, vector<1x1x32xf32>
    %11 = vector.shape_cast %10 : vector<1x1x32xf32> to vector<1x32xf32>
    %cst_9 = arith.constant dense<0.000000e+00> : vector<8xf32>
    %12 = vector.multi_reduction <add>, %1, %cst_9 [1] : vector<8x32xf32> to vector<8xf32>
    %13 = vector.shape_cast %12 : vector<8xf32> to vector<8x1xf32>
    %cst_10 = arith.constant 3.200000e+01 : f32
    %14 = vector.broadcast %cst_10 : f32 to vector<8x1xf32>
    %15 = arith.divf %13, %14 : vector<8x1xf32>
    %16 = vector.broadcast %15 : vector<8x1xf32> to vector<8x32xf32>
    %17 = arith.subf %1, %16 : vector<8x32xf32>
    %18 = arith.mulf %17, %17 : vector<8x32xf32>
    %cst_11 = arith.constant dense<0.000000e+00> : vector<8xf32>
    %19 = vector.multi_reduction <add>, %18, %cst_11 [1] : vector<8x32xf32> to vector<8xf32>
    %20 = vector.shape_cast %19 : vector<8xf32> to vector<8x1xf32>
    %cst_12 = arith.constant 3.200000e+01 : f32
    %21 = vector.broadcast %cst_12 : f32 to vector<8x1xf32>
    %22 = arith.divf %20, %21 : vector<8x1xf32>
    %cst_13 = arith.constant 9.99999974E-6 : f32
    %23 = vector.broadcast %cst_13 : f32 to vector<8x1xf32>
    %24 = arith.addf %22, %23 : vector<8x1xf32>
    %25 = math.rsqrt %24 : vector<8x1xf32>
    %26 = vector.broadcast %25 : vector<8x1xf32> to vector<8x32xf32>
    %27 = arith.mulf %17, %26 : vector<8x32xf32>
    %28 = vector.broadcast %9 : vector<1x32xf32> to vector<8x32xf32>
    %29 = arith.mulf %27, %28 : vector<8x32xf32>
    %30 = vector.broadcast %11 : vector<1x32xf32> to vector<8x32xf32>
    %31 = arith.addf %29, %30 : vector<8x32xf32>
    %32 = arith.truncf %31 : vector<8x32xf32> to vector<8x32xbf16>
    %c0_14 = arith.constant 0 : index
    %c0_15 = arith.constant 0 : index
    %c0_16 = arith.constant 0 : index
    %33 = vector.load %arg4[%c0_14, %c0_15, %c0_16] : memref<2x32x96xbf16, #tpu.memory_space<vmem>>, vector<1x32x96xbf16>
    %34 = vector.shape_cast %33 : vector<1x32x96xbf16> to vector<32x96xbf16>
    %cst_17 = arith.constant dense<0.000000e+00> : vector<8x96xf32>
    %35 = tpu.matmul %32, %34, %cst_17 {dimension_numbers = #tpu.dot_dimension_numbers<[1], [0], [0], [1], [0, 0, 1, 1], [], []>} : vector<8x32xbf16>, vector<32x96xbf16>, vector<8x96xf32> -> vector<8x96xf32>
    %c0_18 = arith.constant 0 : index
    %c0_19 = arith.constant 0 : index
    %c0_20 = arith.constant 0 : index
    %36 = vector.load %arg5[%c0_18, %c0_19, %c0_20] : memref<2x1x96xf32, #tpu.memory_space<vmem>>, vector<1x1x96xf32>
    %37 = vector.shape_cast %36 : vector<1x1x96xf32> to vector<1x96xf32>
    %38 = vector.broadcast %37 : vector<1x96xf32> to vector<8x96xf32>
    %39 = arith.addf %35, %38 : vector<8x96xf32>
    %c0_21 = arith.constant 0 : index
    %c0_22 = arith.constant 0 : index
    %40 = vector.load %arg19[%c0_21, %c0_22] : memref<8x96xf32, #tpu.memory_space<vmem>>, vector<8x96xf32>
    tpu.vector_store %arg19[%c0_21, %c0_22], %39 {strides = array<i32>} : memref<8x96xf32, #tpu.memory_space<vmem>>, vector<8x96xf32>,
    %c0_23 = arith.constant 0 : index
    %c0_24 = arith.constant 0 : index
    %41 = vector.load %arg19[%c0_23, %c0_24] : memref<8x96xf32, #tpu.memory_space<vmem>>, vector<8x8xf32>
    %42 = arith.truncf %41 : vector<8x8xf32> to vector<8x8xbf16>
    %c0_25 = arith.constant 0 : index
    %c32 = arith.constant 32 : index
    %43 = vector.load %arg19[%c0_25, %c32] : memref<8x96xf32, #tpu.memory_space<vmem>>, vector<8x8xf32>
    %44 = arith.truncf %43 : vector<8x8xf32> to vector<8x8xbf16>
    %c0_26 = arith.constant 0 : index
    %c64 = arith.constant 64 : index
    %45 = vector.load %arg19[%c0_26, %c64] : memref<8x96xf32, #tpu.memory_space<vmem>>, vector<8x8xf32>
    %46 = arith.truncf %45 : vector<8x8xf32> to vector<8x8xbf16>
    %47 = tpu.transpose %44, [1, 0] : vector<8x8xbf16> -> vector<8x8xbf16>
    %cst_27 = arith.constant dense<0.000000e+00> : vector<8x8xf32>
    %48 = tpu.matmul %42, %47, %cst_27 {dimension_numbers = #tpu.dot_dimension_numbers<[1], [0], [0], [1], [0, 0, 1, 1], [], []>} : vector<8x8xbf16>, vector<8x8xbf16>, vector<8x8xf32> -> vector<8x8xf32>
    %49 = arith.addf %48, %7 : vector<8x8xf32>
    %cst_28 = arith.constant dense<0xFF800000> : vector<8xf32>
    %50 = vector.multi_reduction <maximumf>, %49, %cst_28 [1] : vector<8x8xf32> to vector<8xf32>
    %51 = vector.shape_cast %50 : vector<8xf32> to vector<8x1xf32>
    %52 = vector.broadcast %51 : vector<8x1xf32> to vector<8x8xf32>
    %53 = arith.subf %49, %52 : vector<8x8xf32>
    %54 = math.exp %53 : vector<8x8xf32>
    %cst_29 = arith.constant dense<0.000000e+00> : vector<8xf32>
    %55 = vector.multi_reduction <add>, %54, %cst_29 [1] : vector<8x8xf32> to vector<8xf32>
    %56 = vector.shape_cast %55 : vector<8xf32> to vector<8x1xf32>
    %57 = tpu.reciprocal %56 {approx = true} : vector<8x1xf32> -> vector<8x1xf32>
    %58 = vector.broadcast %57 : vector<8x1xf32> to vector<8x8xf32>
    %59 = arith.mulf %54, %58 : vector<8x8xf32>
    %60 = arith.truncf %59 : vector<8x8xf32> to vector<8x8xbf16>
    %cst_30 = arith.constant dense<0.000000e+00> : vector<8x8xf32>
    %61 = tpu.matmul %60, %46, %cst_30 {dimension_numbers = #tpu.dot_dimension_numbers<[1], [0], [0], [1], [0, 0, 1, 1], [], []>} : vector<8x8xbf16>, vector<8x8xbf16>, vector<8x8xf32> -> vector<8x8xf32>
    %c0_31 = arith.constant 0 : index
    %c0_32 = arith.constant 0 : index
    %62 = vector.load %arg20[%c0_31, %c0_32] : memref<8x32xf32, #tpu.memory_space<vmem>>, vector<8x8xf32>
    tpu.vector_store %arg20[%c0_31, %c0_32], %61 {strides = array<i32>} : memref<8x32xf32, #tpu.memory_space<vmem>>, vector<8x8xf32>,
    %c0_33 = arith.constant 0 : index
    %c8 = arith.constant 8 : index
    %63 = vector.load %arg19[%c0_33, %c8] : memref<8x96xf32, #tpu.memory_space<vmem>>, vector<8x8xf32>
    %64 = arith.truncf %63 : vector<8x8xf32> to vector<8x8xbf16>
    %c0_34 = arith.constant 0 : index
    %c40 = arith.constant 40 : index
    %65 = vector.load %arg19[%c0_34, %c40] : memref<8x96xf32, #tpu.memory_space<vmem>>, vector<8x8xf32>
    %66 = arith.truncf %65 : vector<8x8xf32> to vector<8x8xbf16>
    %c0_35 = arith.constant 0 : index
    %c72 = arith.constant 72 : index
    %67 = vector.load %arg19[%c0_35, %c72] : memref<8x96xf32, #tpu.memory_space<vmem>>, vector<8x8xf32>
    %68 = arith.truncf %67 : vector<8x8xf32> to vector<8x8xbf16>
    %69 = tpu.transpose %66, [1, 0] : vector<8x8xbf16> -> vector<8x8xbf16>
    %cst_36 = arith.constant dense<0.000000e+00> : vector<8x8xf32>
    %70 = tpu.matmul %64, %69, %cst_36 {dimension_numbers = #tpu.dot_dimension_numbers<[1], [0], [0], [1], [0, 0, 1, 1], [], []>} : vector<8x8xbf16>, vector<8x8xbf16>, vector<8x8xf32> -> vector<8x8xf32>
    %71 = arith.addf %70, %7 : vector<8x8xf32>
    %cst_37 = arith.constant dense<0xFF800000> : vector<8xf32>
    %72 = vector.multi_reduction <maximumf>, %71, %cst_37 [1] : vector<8x8xf32> to vector<8xf32>
    %73 = vector.shape_cast %72 : vector<8xf32> to vector<8x1xf32>
    %74 = vector.broadcast %73 : vector<8x1xf32> to vector<8x8xf32>
    %75 = arith.subf %71, %74 : vector<8x8xf32>
    %76 = math.exp %75 : vector<8x8xf32>
    %cst_38 = arith.constant dense<0.000000e+00> : vector<8xf32>
    %77 = vector.multi_reduction <add>, %76, %cst_38 [1] : vector<8x8xf32> to vector<8xf32>
    %78 = vector.shape_cast %77 : vector<8xf32> to vector<8x1xf32>
    %79 = tpu.reciprocal %78 {approx = true} : vector<8x1xf32> -> vector<8x1xf32>
    %80 = vector.broadcast %79 : vector<8x1xf32> to vector<8x8xf32>
    %81 = arith.mulf %76, %80 : vector<8x8xf32>
    %82 = arith.truncf %81 : vector<8x8xf32> to vector<8x8xbf16>
    %cst_39 = arith.constant dense<0.000000e+00> : vector<8x8xf32>
    %83 = tpu.matmul %82, %68, %cst_39 {dimension_numbers = #tpu.dot_dimension_numbers<[1], [0], [0], [1], [0, 0, 1, 1], [], []>} : vector<8x8xbf16>, vector<8x8xbf16>, vector<8x8xf32> -> vector<8x8xf32>
    %c0_40 = arith.constant 0 : index
    %c8_41 = arith.constant 8 : index
    %84 = vector.load %arg20[%c0_40, %c8_41] : memref<8x32xf32, #tpu.memory_space<vmem>>, vector<8x8xf32>
    tpu.vector_store %arg20[%c0_40, %c8_41], %83 {strides = array<i32>} : memref<8x32xf32, #tpu.memory_space<vmem>>, vector<8x8xf32>,
    %c0_42 = arith.constant 0 : index
    %c16 = arith.constant 16 : index
    %85 = vector.load %arg19[%c0_42, %c16] : memref<8x96xf32, #tpu.memory_space<vmem>>, vector<8x8xf32>
    %86 = arith.truncf %85 : vector<8x8xf32> to vector<8x8xbf16>
    %c0_43 = arith.constant 0 : index
    %c48 = arith.constant 48 : index
    %87 = vector.load %arg19[%c0_43, %c48] : memref<8x96xf32, #tpu.memory_space<vmem>>, vector<8x8xf32>
    %88 = arith.truncf %87 : vector<8x8xf32> to vector<8x8xbf16>
    %c0_44 = arith.constant 0 : index
    %c80 = arith.constant 80 : index
    %89 = vector.load %arg19[%c0_44, %c80] : memref<8x96xf32, #tpu.memory_space<vmem>>, vector<8x8xf32>
    %90 = arith.truncf %89 : vector<8x8xf32> to vector<8x8xbf16>
    %91 = tpu.transpose %88, [1, 0] : vector<8x8xbf16> -> vector<8x8xbf16>
    %cst_45 = arith.constant dense<0.000000e+00> : vector<8x8xf32>
    %92 = tpu.matmul %86, %91, %cst_45 {dimension_numbers = #tpu.dot_dimension_numbers<[1], [0], [0], [1], [0, 0, 1, 1], [], []>} : vector<8x8xbf16>, vector<8x8xbf16>, vector<8x8xf32> -> vector<8x8xf32>
    %93 = arith.addf %92, %7 : vector<8x8xf32>
    %cst_46 = arith.constant dense<0xFF800000> : vector<8xf32>
    %94 = vector.multi_reduction <maximumf>, %93, %cst_46 [1] : vector<8x8xf32> to vector<8xf32>
    %95 = vector.shape_cast %94 : vector<8xf32> to vector<8x1xf32>
    %96 = vector.broadcast %95 : vector<8x1xf32> to vector<8x8xf32>
    %97 = arith.subf %93, %96 : vector<8x8xf32>
    %98 = math.exp %97 : vector<8x8xf32>
    %cst_47 = arith.constant dense<0.000000e+00> : vector<8xf32>
    %99 = vector.multi_reduction <add>, %98, %cst_47 [1] : vector<8x8xf32> to vector<8xf32>
    %100 = vector.shape_cast %99 : vector<8xf32> to vector<8x1xf32>
    %101 = tpu.reciprocal %100 {approx = true} : vector<8x1xf32> -> vector<8x1xf32>
    %102 = vector.broadcast %101 : vector<8x1xf32> to vector<8x8xf32>
    %103 = arith.mulf %98, %102 : vector<8x8xf32>
    %104 = arith.truncf %103 : vector<8x8xf32> to vector<8x8xbf16>
    %cst_48 = arith.constant dense<0.000000e+00> : vector<8x8xf32>
    %105 = tpu.matmul %104, %90, %cst_48 {dimension_numbers = #tpu.dot_dimension_numbers<[1], [0], [0], [1], [0, 0, 1, 1], [], []>} : vector<8x8xbf16>, vector<8x8xbf16>, vector<8x8xf32> -> vector<8x8xf32>
    %c0_49 = arith.constant 0 : index
    %c16_50 = arith.constant 16 : index
    %106 = vector.load %arg20[%c0_49, %c16_50] : memref<8x32xf32, #tpu.memory_space<vmem>>, vector<8x8xf32>
    tpu.vector_store %arg20[%c0_49, %c16_50], %105 {strides = array<i32>} : memref<8x32xf32, #tpu.memory_space<vmem>>, vector<8x8xf32>,
    %c0_51 = arith.constant 0 : index
    %c24 = arith.constant 24 : index
    %107 = vector.load %arg19[%c0_51, %c24] : memref<8x96xf32, #tpu.memory_space<vmem>>, vector<8x8xf32>
    %108 = arith.truncf %107 : vector<8x8xf32> to vector<8x8xbf16>
    %c0_52 = arith.constant 0 : index
    %c56 = arith.constant 56 : index
    %109 = vector.load %arg19[%c0_52, %c56] : memref<8x96xf32, #tpu.memory_space<vmem>>, vector<8x8xf32>
    %110 = arith.truncf %109 : vector<8x8xf32> to vector<8x8xbf16>
    %c0_53 = arith.constant 0 : index
    %c88 = arith.constant 88 : index
    %111 = vector.load %arg19[%c0_53, %c88] : memref<8x96xf32, #tpu.memory_space<vmem>>, vector<8x8xf32>
    %112 = arith.truncf %111 : vector<8x8xf32> to vector<8x8xbf16>
    %113 = tpu.transpose %110, [1, 0] : vector<8x8xbf16> -> vector<8x8xbf16>
    %cst_54 = arith.constant dense<0.000000e+00> : vector<8x8xf32>
    %114 = tpu.matmul %108, %113, %cst_54 {dimension_numbers = #tpu.dot_dimension_numbers<[1], [0], [0], [1], [0, 0, 1, 1], [], []>} : vector<8x8xbf16>, vector<8x8xbf16>, vector<8x8xf32> -> vector<8x8xf32>
    %115 = arith.addf %114, %7 : vector<8x8xf32>
    %cst_55 = arith.constant dense<0xFF800000> : vector<8xf32>
    %116 = vector.multi_reduction <maximumf>, %115, %cst_55 [1] : vector<8x8xf32> to vector<8xf32>
    %117 = vector.shape_cast %116 : vector<8xf32> to vector<8x1xf32>
    %118 = vector.broadcast %117 : vector<8x1xf32> to vector<8x8xf32>
    %119 = arith.subf %115, %118 : vector<8x8xf32>
    %120 = math.exp %119 : vector<8x8xf32>
    %cst_56 = arith.constant dense<0.000000e+00> : vector<8xf32>
    %121 = vector.multi_reduction <add>, %120, %cst_56 [1] : vector<8x8xf32> to vector<8xf32>
    %122 = vector.shape_cast %121 : vector<8xf32> to vector<8x1xf32>
    %123 = tpu.reciprocal %122 {approx = true} : vector<8x1xf32> -> vector<8x1xf32>
    %124 = vector.broadcast %123 : vector<8x1xf32> to vector<8x8xf32>
    %125 = arith.mulf %120, %124 : vector<8x8xf32>
    %126 = arith.truncf %125 : vector<8x8xf32> to vector<8x8xbf16>
    %cst_57 = arith.constant dense<0.000000e+00> : vector<8x8xf32>
    %127 = tpu.matmul %126, %112, %cst_57 {dimension_numbers = #tpu.dot_dimension_numbers<[1], [0], [0], [1], [0, 0, 1, 1], [], []>} : vector<8x8xbf16>, vector<8x8xbf16>, vector<8x8xf32> -> vector<8x8xf32>
    %c0_58 = arith.constant 0 : index
    %c24_59 = arith.constant 24 : index
    %128 = vector.load %arg20[%c0_58, %c24_59] : memref<8x32xf32, #tpu.memory_space<vmem>>, vector<8x8xf32>
    tpu.vector_store %arg20[%c0_58, %c24_59], %127 {strides = array<i32>} : memref<8x32xf32, #tpu.memory_space<vmem>>, vector<8x8xf32>,
    %c0_60 = arith.constant 0 : index
    %c0_61 = arith.constant 0 : index
    %129 = vector.load %arg20[%c0_60, %c0_61] : memref<8x32xf32, #tpu.memory_space<vmem>>, vector<8x32xf32>
    %130 = arith.truncf %129 : vector<8x32xf32> to vector<8x32xbf16>
    %c0_62 = arith.constant 0 : index
    %c0_63 = arith.constant 0 : index
    %c0_64 = arith.constant 0 : index
    %131 = vector.load %arg6[%c0_62, %c0_63, %c0_64] : memref<2x32x32xbf16, #tpu.memory_space<vmem>>, vector<1x32x32xbf16>
    %132 = vector.shape_cast %131 : vector<1x32x32xbf16> to vector<32x32xbf16>
    %cst_65 = arith.constant dense<0.000000e+00> : vector<8x32xf32>
    %133 = tpu.matmul %130, %132, %cst_65 {dimension_numbers = #tpu.dot_dimension_numbers<[1], [0], [0], [1], [0, 0, 1, 1], [], []>} : vector<8x32xbf16>, vector<32x32xbf16>, vector<8x32xf32> -> vector<8x32xf32>
    %134 = arith.addf %1, %133 : vector<8x32xf32>
    %c0_66 = arith.constant 0 : index
    %c0_67 = arith.constant 0 : index
    %c0_68 = arith.constant 0 : index
    %135 = vector.load %arg7[%c0_66, %c0_67, %c0_68] : memref<2x1x32xf32, #tpu.memory_space<vmem>>, vector<1x1x32xf32>
    %136 = vector.shape_cast %135 : vector<1x1x32xf32> to vector<1x32xf32>
    %137 = vector.broadcast %136 : vector<1x32xf32> to vector<8x32xf32>
    %138 = arith.addf %134, %137 : vector<8x32xf32>
    %c0_69 = arith.constant 0 : index
    %c0_70 = arith.constant 0 : index
    %c0_71 = arith.constant 0 : index
    %139 = vector.load %arg8[%c0_69, %c0_70, %c0_71] : memref<2x1x32xf32, #tpu.memory_space<vmem>>, vector<1x1x32xf32>
    %140 = vector.shape_cast %139 : vector<1x1x32xf32> to vector<1x32xf32>
    %c0_72 = arith.constant 0 : index
    %c0_73 = arith.constant 0 : index
    %c0_74 = arith.constant 0 : index
    %141 = vector.load %arg9[%c0_72, %c0_73, %c0_74] : memref<2x1x32xf32, #tpu.memory_space<vmem>>, vector<1x1x32xf32>
    %142 = vector.shape_cast %141 : vector<1x1x32xf32> to vector<1x32xf32>
    %cst_75 = arith.constant dense<0.000000e+00> : vector<8xf32>
    %143 = vector.multi_reduction <add>, %138, %cst_75 [1] : vector<8x32xf32> to vector<8xf32>
    %144 = vector.shape_cast %143 : vector<8xf32> to vector<8x1xf32>
    %cst_76 = arith.constant 3.200000e+01 : f32
    %145 = vector.broadcast %cst_76 : f32 to vector<8x1xf32>
    %146 = arith.divf %144, %145 : vector<8x1xf32>
    %147 = vector.broadcast %146 : vector<8x1xf32> to vector<8x32xf32>
    %148 = arith.subf %138, %147 : vector<8x32xf32>
    %149 = arith.mulf %148, %148 : vector<8x32xf32>
    %cst_77 = arith.constant dense<0.000000e+00> : vector<8xf32>
    %150 = vector.multi_reduction <add>, %149, %cst_77 [1] : vector<8x32xf32> to vector<8xf32>
    %151 = vector.shape_cast %150 : vector<8xf32> to vector<8x1xf32>
    %cst_78 = arith.constant 3.200000e+01 : f32
    %152 = vector.broadcast %cst_78 : f32 to vector<8x1xf32>
    %153 = arith.divf %151, %152 : vector<8x1xf32>
    %cst_79 = arith.constant 9.99999974E-6 : f32
    %154 = vector.broadcast %cst_79 : f32 to vector<8x1xf32>
    %155 = arith.addf %153, %154 : vector<8x1xf32>
    %156 = math.rsqrt %155 : vector<8x1xf32>
    %157 = vector.broadcast %156 : vector<8x1xf32> to vector<8x32xf32>
    %158 = arith.mulf %148, %157 : vector<8x32xf32>
    %159 = vector.broadcast %140 : vector<1x32xf32> to vector<8x32xf32>
    %160 = arith.mulf %158, %159 : vector<8x32xf32>
    %161 = vector.broadcast %142 : vector<1x32xf32> to vector<8x32xf32>
    %162 = arith.addf %160, %161 : vector<8x32xf32>
    %163 = arith.truncf %162 : vector<8x32xf32> to vector<8x32xbf16>
    %c0_80 = arith.constant 0 : index
    %c0_81 = arith.constant 0 : index
    %c0_82 = arith.constant 0 : index
    %164 = vector.load %arg10[%c0_80, %c0_81, %c0_82] : memref<2x32x128xbf16, #tpu.memory_space<vmem>>, vector<1x32x128xbf16>
    %165 = vector.shape_cast %164 : vector<1x32x128xbf16> to vector<32x128xbf16>
    %cst_83 = arith.constant dense<0.000000e+00> : vector<8x128xf32>
    %166 = tpu.matmul %163, %165, %cst_83 {dimension_numbers = #tpu.dot_dimension_numbers<[1], [0], [0], [1], [0, 0, 1, 1], [], []>} : vector<8x32xbf16>, vector<32x128xbf16>, vector<8x128xf32> -> vector<8x128xf32>
    %c0_84 = arith.constant 0 : index
    %c0_85 = arith.constant 0 : index
    %c0_86 = arith.constant 0 : index
    %167 = vector.load %arg11[%c0_84, %c0_85, %c0_86] : memref<2x1x128xf32, #tpu.memory_space<vmem>>, vector<1x1x128xf32>
    %168 = vector.shape_cast %167 : vector<1x1x128xf32> to vector<1x128xf32>
    %169 = vector.broadcast %168 : vector<1x128xf32> to vector<8x128xf32>
    %170 = arith.addf %166, %169 : vector<8x128xf32>
    %cst_87 = arith.constant 0.000000e+00 : f32
    %171 = vector.broadcast %cst_87 : f32 to vector<8x128xf32>
    %172 = arith.maximumf %170, %171 : vector<8x128xf32>
    %173 = arith.truncf %172 : vector<8x128xf32> to vector<8x128xbf16>
    %c0_88 = arith.constant 0 : index
    %c0_89 = arith.constant 0 : index
    %c0_90 = arith.constant 0 : index
    %174 = vector.load %arg12[%c0_88, %c0_89, %c0_90] : memref<2x128x32xbf16, #tpu.memory_space<vmem>>, vector<1x128x32xbf16>
    %175 = vector.shape_cast %174 : vector<1x128x32xbf16> to vector<128x32xbf16>
    %cst_91 = arith.constant dense<0.000000e+00> : vector<8x32xf32>
    %176 = tpu.matmul %173, %175, %cst_91 {dimension_numbers = #tpu.dot_dimension_numbers<[1], [0], [0], [1], [0, 0, 1, 1], [], []>} : vector<8x128xbf16>, vector<128x32xbf16>, vector<8x32xf32> -> vector<8x32xf32>
    %177 = arith.addf %138, %176 : vector<8x32xf32>
    %c0_92 = arith.constant 0 : index
    %c0_93 = arith.constant 0 : index
    %c0_94 = arith.constant 0 : index
    %178 = vector.load %arg13[%c0_92, %c0_93, %c0_94] : memref<2x1x32xf32, #tpu.memory_space<vmem>>, vector<1x1x32xf32>
    %179 = vector.shape_cast %178 : vector<1x1x32xf32> to vector<1x32xf32>
    %180 = vector.broadcast %179 : vector<1x32xf32> to vector<8x32xf32>
    %181 = arith.addf %177, %180 : vector<8x32xf32>
    %c1 = arith.constant 1 : index
    %c0_95 = arith.constant 0 : index
    %c0_96 = arith.constant 0 : index
    %182 = vector.load %arg2[%c1, %c0_95, %c0_96] : memref<2x1x32xf32, #tpu.memory_space<vmem>>, vector<1x1x32xf32>
    %183 = vector.shape_cast %182 : vector<1x1x32xf32> to vector<1x32xf32>
    %c1_97 = arith.constant 1 : index
    %c0_98 = arith.constant 0 : index
    %c0_99 = arith.constant 0 : index
    %184 = vector.load %arg3[%c1_97, %c0_98, %c0_99] : memref<2x1x32xf32, #tpu.memory_space<vmem>>, vector<1x1x32xf32>
    %185 = vector.shape_cast %184 : vector<1x1x32xf32> to vector<1x32xf32>
    %cst_100 = arith.constant dense<0.000000e+00> : vector<8xf32>
    %186 = vector.multi_reduction <add>, %181, %cst_100 [1] : vector<8x32xf32> to vector<8xf32>
    %187 = vector.shape_cast %186 : vector<8xf32> to vector<8x1xf32>
    %cst_101 = arith.constant 3.200000e+01 : f32
    %188 = vector.broadcast %cst_101 : f32 to vector<8x1xf32>
    %189 = arith.divf %187, %188 : vector<8x1xf32>
    %190 = vector.broadcast %189 : vector<8x1xf32> to vector<8x32xf32>
    %191 = arith.subf %181, %190 : vector<8x32xf32>
    %192 = arith.mulf %191, %191 : vector<8x32xf32>
    %cst_102 = arith.constant dense<0.000000e+00> : vector<8xf32>
    %193 = vector.multi_reduction <add>, %192, %cst_102 [1] : vector<8x32xf32> to vector<8xf32>
    %194 = vector.shape_cast %193 : vector<8xf32> to vector<8x1xf32>
    %cst_103 = arith.constant 3.200000e+01 : f32
    %195 = vector.broadcast %cst_103 : f32 to vector<8x1xf32>
    %196 = arith.divf %194, %195 : vector<8x1xf32>
    %cst_104 = arith.constant 9.99999974E-6 : f32
    %197 = vector.broadcast %cst_104 : f32 to vector<8x1xf32>
    %198 = arith.addf %196, %197 : vector<8x1xf32>
    %199 = math.rsqrt %198 : vector<8x1xf32>
    %200 = vector.broadcast %199 : vector<8x1xf32> to vector<8x32xf32>
    %201 = arith.mulf %191, %200 : vector<8x32xf32>
    %202 = vector.broadcast %183 : vector<1x32xf32> to vector<8x32xf32>
    %203 = arith.mulf %201, %202 : vector<8x32xf32>
    %204 = vector.broadcast %185 : vector<1x32xf32> to vector<8x32xf32>
    %205 = arith.addf %203, %204 : vector<8x32xf32>
    %206 = arith.truncf %205 : vector<8x32xf32> to vector<8x32xbf16>
    %c1_105 = arith.constant 1 : index
    %c0_106 = arith.constant 0 : index
    %c0_107 = arith.constant 0 : index
    %207 = vector.load %arg4[%c1_105, %c0_106, %c0_107] : memref<2x32x96xbf16, #tpu.memory_space<vmem>>, vector<1x32x96xbf16>
    %208 = vector.shape_cast %207 : vector<1x32x96xbf16> to vector<32x96xbf16>
    %cst_108 = arith.constant dense<0.000000e+00> : vector<8x96xf32>
    %209 = tpu.matmul %206, %208, %cst_108 {dimension_numbers = #tpu.dot_dimension_numbers<[1], [0], [0], [1], [0, 0, 1, 1], [], []>} : vector<8x32xbf16>, vector<32x96xbf16>, vector<8x96xf32> -> vector<8x96xf32>
    %c1_109 = arith.constant 1 : index
    %c0_110 = arith.constant 0 : index
    %c0_111 = arith.constant 0 : index
    %210 = vector.load %arg5[%c1_109, %c0_110, %c0_111] : memref<2x1x96xf32, #tpu.memory_space<vmem>>, vector<1x1x96xf32>
    %211 = vector.shape_cast %210 : vector<1x1x96xf32> to vector<1x96xf32>
    %212 = vector.broadcast %211 : vector<1x96xf32> to vector<8x96xf32>
    %213 = arith.addf %209, %212 : vector<8x96xf32>
    %c0_112 = arith.constant 0 : index
    %c0_113 = arith.constant 0 : index
    %214 = vector.load %arg19[%c0_112, %c0_113] : memref<8x96xf32, #tpu.memory_space<vmem>>, vector<8x96xf32>
    tpu.vector_store %arg19[%c0_112, %c0_113], %213 {strides = array<i32>} : memref<8x96xf32, #tpu.memory_space<vmem>>, vector<8x96xf32>,
    %c0_114 = arith.constant 0 : index
    %c0_115 = arith.constant 0 : index
    %215 = vector.load %arg19[%c0_114, %c0_115] : memref<8x96xf32, #tpu.memory_space<vmem>>, vector<8x8xf32>
    %216 = arith.truncf %215 : vector<8x8xf32> to vector<8x8xbf16>
    %c0_116 = arith.constant 0 : index
    %c32_117 = arith.constant 32 : index
    %217 = vector.load %arg19[%c0_116, %c32_117] : memref<8x96xf32, #tpu.memory_space<vmem>>, vector<8x8xf32>
    %218 = arith.truncf %217 : vector<8x8xf32> to vector<8x8xbf16>
    %c0_118 = arith.constant 0 : index
    %c64_119 = arith.constant 64 : index
    %219 = vector.load %arg19[%c0_118, %c64_119] : memref<8x96xf32, #tpu.memory_space<vmem>>, vector<8x8xf32>
    %220 = arith.truncf %219 : vector<8x8xf32> to vector<8x8xbf16>
    %221 = tpu.transpose %218, [1, 0] : vector<8x8xbf16> -> vector<8x8xbf16>
    %cst_120 = arith.constant dense<0.000000e+00> : vector<8x8xf32>
    %222 = tpu.matmul %216, %221, %cst_120 {dimension_numbers = #tpu.dot_dimension_numbers<[1], [0], [0], [1], [0, 0, 1, 1], [], []>} : vector<8x8xbf16>, vector<8x8xbf16>, vector<8x8xf32> -> vector<8x8xf32>
    %223 = arith.addf %222, %7 : vector<8x8xf32>
    %cst_121 = arith.constant dense<0xFF800000> : vector<8xf32>
    %224 = vector.multi_reduction <maximumf>, %223, %cst_121 [1] : vector<8x8xf32> to vector<8xf32>
    %225 = vector.shape_cast %224 : vector<8xf32> to vector<8x1xf32>
    %226 = vector.broadcast %225 : vector<8x1xf32> to vector<8x8xf32>
    %227 = arith.subf %223, %226 : vector<8x8xf32>
    %228 = math.exp %227 : vector<8x8xf32>
    %cst_122 = arith.constant dense<0.000000e+00> : vector<8xf32>
    %229 = vector.multi_reduction <add>, %228, %cst_122 [1] : vector<8x8xf32> to vector<8xf32>
    %230 = vector.shape_cast %229 : vector<8xf32> to vector<8x1xf32>
    %231 = tpu.reciprocal %230 {approx = true} : vector<8x1xf32> -> vector<8x1xf32>
    %232 = vector.broadcast %231 : vector<8x1xf32> to vector<8x8xf32>
    %233 = arith.mulf %228, %232 : vector<8x8xf32>
    %234 = arith.truncf %233 : vector<8x8xf32> to vector<8x8xbf16>
    %cst_123 = arith.constant dense<0.000000e+00> : vector<8x8xf32>
    %235 = tpu.matmul %234, %220, %cst_123 {dimension_numbers = #tpu.dot_dimension_numbers<[1], [0], [0], [1], [0, 0, 1, 1], [], []>} : vector<8x8xbf16>, vector<8x8xbf16>, vector<8x8xf32> -> vector<8x8xf32>
    %c0_124 = arith.constant 0 : index
    %c0_125 = arith.constant 0 : index
    %236 = vector.load %arg20[%c0_124, %c0_125] : memref<8x32xf32, #tpu.memory_space<vmem>>, vector<8x8xf32>
    tpu.vector_store %arg20[%c0_124, %c0_125], %235 {strides = array<i32>} : memref<8x32xf32, #tpu.memory_space<vmem>>, vector<8x8xf32>,
    %c0_126 = arith.constant 0 : index
    %c8_127 = arith.constant 8 : index
    %237 = vector.load %arg19[%c0_126, %c8_127] : memref<8x96xf32, #tpu.memory_space<vmem>>, vector<8x8xf32>
    %238 = arith.truncf %237 : vector<8x8xf32> to vector<8x8xbf16>
    %c0_128 = arith.constant 0 : index
    %c40_129 = arith.constant 40 : index
    %239 = vector.load %arg19[%c0_128, %c40_129] : memref<8x96xf32, #tpu.memory_space<vmem>>, vector<8x8xf32>
    %240 = arith.truncf %239 : vector<8x8xf32> to vector<8x8xbf16>
    %c0_130 = arith.constant 0 : index
    %c72_131 = arith.constant 72 : index
    %241 = vector.load %arg19[%c0_130, %c72_131] : memref<8x96xf32, #tpu.memory_space<vmem>>, vector<8x8xf32>
    %242 = arith.truncf %241 : vector<8x8xf32> to vector<8x8xbf16>
    %243 = tpu.transpose %240, [1, 0] : vector<8x8xbf16> -> vector<8x8xbf16>
    %cst_132 = arith.constant dense<0.000000e+00> : vector<8x8xf32>
    %244 = tpu.matmul %238, %243, %cst_132 {dimension_numbers = #tpu.dot_dimension_numbers<[1], [0], [0], [1], [0, 0, 1, 1], [], []>} : vector<8x8xbf16>, vector<8x8xbf16>, vector<8x8xf32> -> vector<8x8xf32>
    %245 = arith.addf %244, %7 : vector<8x8xf32>
    %cst_133 = arith.constant dense<0xFF800000> : vector<8xf32>
    %246 = vector.multi_reduction <maximumf>, %245, %cst_133 [1] : vector<8x8xf32> to vector<8xf32>
    %247 = vector.shape_cast %246 : vector<8xf32> to vector<8x1xf32>
    %248 = vector.broadcast %247 : vector<8x1xf32> to vector<8x8xf32>
    %249 = arith.subf %245, %248 : vector<8x8xf32>
    %250 = math.exp %249 : vector<8x8xf32>
    %cst_134 = arith.constant dense<0.000000e+00> : vector<8xf32>
    %251 = vector.multi_reduction <add>, %250, %cst_134 [1] : vector<8x8xf32> to vector<8xf32>
    %252 = vector.shape_cast %251 : vector<8xf32> to vector<8x1xf32>
    %253 = tpu.reciprocal %252 {approx = true} : vector<8x1xf32> -> vector<8x1xf32>
    %254 = vector.broadcast %253 : vector<8x1xf32> to vector<8x8xf32>
    %255 = arith.mulf %250, %254 : vector<8x8xf32>
    %256 = arith.truncf %255 : vector<8x8xf32> to vector<8x8xbf16>
    %cst_135 = arith.constant dense<0.000000e+00> : vector<8x8xf32>
    %257 = tpu.matmul %256, %242, %cst_135 {dimension_numbers = #tpu.dot_dimension_numbers<[1], [0], [0], [1], [0, 0, 1, 1], [], []>} : vector<8x8xbf16>, vector<8x8xbf16>, vector<8x8xf32> -> vector<8x8xf32>
    %c0_136 = arith.constant 0 : index
    %c8_137 = arith.constant 8 : index
    %258 = vector.load %arg20[%c0_136, %c8_137] : memref<8x32xf32, #tpu.memory_space<vmem>>, vector<8x8xf32>
    tpu.vector_store %arg20[%c0_136, %c8_137], %257 {strides = array<i32>} : memref<8x32xf32, #tpu.memory_space<vmem>>, vector<8x8xf32>,
    %c0_138 = arith.constant 0 : index
    %c16_139 = arith.constant 16 : index
    %259 = vector.load %arg19[%c0_138, %c16_139] : memref<8x96xf32, #tpu.memory_space<vmem>>, vector<8x8xf32>
    %260 = arith.truncf %259 : vector<8x8xf32> to vector<8x8xbf16>
    %c0_140 = arith.constant 0 : index
    %c48_141 = arith.constant 48 : index
    %261 = vector.load %arg19[%c0_140, %c48_141] : memref<8x96xf32, #tpu.memory_space<vmem>>, vector<8x8xf32>
    %262 = arith.truncf %261 : vector<8x8xf32> to vector<8x8xbf16>
    %c0_142 = arith.constant 0 : index
    %c80_143 = arith.constant 80 : index
    %263 = vector.load %arg19[%c0_142, %c80_143] : memref<8x96xf32, #tpu.memory_space<vmem>>, vector<8x8xf32>
    %264 = arith.truncf %263 : vector<8x8xf32> to vector<8x8xbf16>
    %265 = tpu.transpose %262, [1, 0] : vector<8x8xbf16> -> vector<8x8xbf16>
    %cst_144 = arith.constant dense<0.000000e+00> : vector<8x8xf32>
    %266 = tpu.matmul %260, %265, %cst_144 {dimension_numbers = #tpu.dot_dimension_numbers<[1], [0], [0], [1], [0, 0, 1, 1], [], []>} : vector<8x8xbf16>, vector<8x8xbf16>, vector<8x8xf32> -> vector<8x8xf32>
    %267 = arith.addf %266, %7 : vector<8x8xf32>
    %cst_145 = arith.constant dense<0xFF800000> : vector<8xf32>
    %268 = vector.multi_reduction <maximumf>, %267, %cst_145 [1] : vector<8x8xf32> to vector<8xf32>
    %269 = vector.shape_cast %268 : vector<8xf32> to vector<8x1xf32>
    %270 = vector.broadcast %269 : vector<8x1xf32> to vector<8x8xf32>
    %271 = arith.subf %267, %270 : vector<8x8xf32>
    %272 = math.exp %271 : vector<8x8xf32>
    %cst_146 = arith.constant dense<0.000000e+00> : vector<8xf32>
    %273 = vector.multi_reduction <add>, %272, %cst_146 [1] : vector<8x8xf32> to vector<8xf32>
    %274 = vector.shape_cast %273 : vector<8xf32> to vector<8x1xf32>
    %275 = tpu.reciprocal %274 {approx = true} : vector<8x1xf32> -> vector<8x1xf32>
    %276 = vector.broadcast %275 : vector<8x1xf32> to vector<8x8xf32>
    %277 = arith.mulf %272, %276 : vector<8x8xf32>
    %278 = arith.truncf %277 : vector<8x8xf32> to vector<8x8xbf16>
    %cst_147 = arith.constant dense<0.000000e+00> : vector<8x8xf32>
    %279 = tpu.matmul %278, %264, %cst_147 {dimension_numbers = #tpu.dot_dimension_numbers<[1], [0], [0], [1], [0, 0, 1, 1], [], []>} : vector<8x8xbf16>, vector<8x8xbf16>, vector<8x8xf32> -> vector<8x8xf32>
    %c0_148 = arith.constant 0 : index
    %c16_149 = arith.constant 16 : index
    %280 = vector.load %arg20[%c0_148, %c16_149] : memref<8x32xf32, #tpu.memory_space<vmem>>, vector<8x8xf32>
    tpu.vector_store %arg20[%c0_148, %c16_149], %279 {strides = array<i32>} : memref<8x32xf32, #tpu.memory_space<vmem>>, vector<8x8xf32>,
    %c0_150 = arith.constant 0 : index
    %c24_151 = arith.constant 24 : index
    %281 = vector.load %arg19[%c0_150, %c24_151] : memref<8x96xf32, #tpu.memory_space<vmem>>, vector<8x8xf32>
    %282 = arith.truncf %281 : vector<8x8xf32> to vector<8x8xbf16>
    %c0_152 = arith.constant 0 : index
    %c56_153 = arith.constant 56 : index
    %283 = vector.load %arg19[%c0_152, %c56_153] : memref<8x96xf32, #tpu.memory_space<vmem>>, vector<8x8xf32>
    %284 = arith.truncf %283 : vector<8x8xf32> to vector<8x8xbf16>
    %c0_154 = arith.constant 0 : index
    %c88_155 = arith.constant 88 : index
    %285 = vector.load %arg19[%c0_154, %c88_155] : memref<8x96xf32, #tpu.memory_space<vmem>>, vector<8x8xf32>
    %286 = arith.truncf %285 : vector<8x8xf32> to vector<8x8xbf16>
    %287 = tpu.transpose %284, [1, 0] : vector<8x8xbf16> -> vector<8x8xbf16>
    %cst_156 = arith.constant dense<0.000000e+00> : vector<8x8xf32>
    %288 = tpu.matmul %282, %287, %cst_156 {dimension_numbers = #tpu.dot_dimension_numbers<[1], [0], [0], [1], [0, 0, 1, 1], [], []>} : vector<8x8xbf16>, vector<8x8xbf16>, vector<8x8xf32> -> vector<8x8xf32>
    %289 = arith.addf %288, %7 : vector<8x8xf32>
    %cst_157 = arith.constant dense<0xFF800000> : vector<8xf32>
    %290 = vector.multi_reduction <maximumf>, %289, %cst_157 [1] : vector<8x8xf32> to vector<8xf32>
    %291 = vector.shape_cast %290 : vector<8xf32> to vector<8x1xf32>
    %292 = vector.broadcast %291 : vector<8x1xf32> to vector<8x8xf32>
    %293 = arith.subf %289, %292 : vector<8x8xf32>
    %294 = math.exp %293 : vector<8x8xf32>
    %cst_158 = arith.constant dense<0.000000e+00> : vector<8xf32>
    %295 = vector.multi_reduction <add>, %294, %cst_158 [1] : vector<8x8xf32> to vector<8xf32>
    %296 = vector.shape_cast %295 : vector<8xf32> to vector<8x1xf32>
    %297 = tpu.reciprocal %296 {approx = true} : vector<8x1xf32> -> vector<8x1xf32>
    %298 = vector.broadcast %297 : vector<8x1xf32> to vector<8x8xf32>
    %299 = arith.mulf %294, %298 : vector<8x8xf32>
    %300 = arith.truncf %299 : vector<8x8xf32> to vector<8x8xbf16>
    %cst_159 = arith.constant dense<0.000000e+00> : vector<8x8xf32>
    %301 = tpu.matmul %300, %286, %cst_159 {dimension_numbers = #tpu.dot_dimension_numbers<[1], [0], [0], [1], [0, 0, 1, 1], [], []>} : vector<8x8xbf16>, vector<8x8xbf16>, vector<8x8xf32> -> vector<8x8xf32>
    %c0_160 = arith.constant 0 : index
    %c24_161 = arith.constant 24 : index
    %302 = vector.load %arg20[%c0_160, %c24_161] : memref<8x32xf32, #tpu.memory_space<vmem>>, vector<8x8xf32>
    tpu.vector_store %arg20[%c0_160, %c24_161], %301 {strides = array<i32>} : memref<8x32xf32, #tpu.memory_space<vmem>>, vector<8x8xf32>,
    %c0_162 = arith.constant 0 : index
    %c0_163 = arith.constant 0 : index
    %303 = vector.load %arg20[%c0_162, %c0_163] : memref<8x32xf32, #tpu.memory_space<vmem>>, vector<8x32xf32>
    %304 = arith.truncf %303 : vector<8x32xf32> to vector<8x32xbf16>
    %c1_164 = arith.constant 1 : index
    %c0_165 = arith.constant 0 : index
    %c0_166 = arith.constant 0 : index
    %305 = vector.load %arg6[%c1_164, %c0_165, %c0_166] : memref<2x32x32xbf16, #tpu.memory_space<vmem>>, vector<1x32x32xbf16>
    %306 = vector.shape_cast %305 : vector<1x32x32xbf16> to vector<32x32xbf16>
    %cst_167 = arith.constant dense<0.000000e+00> : vector<8x32xf32>
    %307 = tpu.matmul %304, %306, %cst_167 {dimension_numbers = #tpu.dot_dimension_numbers<[1], [0], [0], [1], [0, 0, 1, 1], [], []>} : vector<8x32xbf16>, vector<32x32xbf16>, vector<8x32xf32> -> vector<8x32xf32>
    %308 = arith.addf %181, %307 : vector<8x32xf32>
    %c1_168 = arith.constant 1 : index
    %c0_169 = arith.constant 0 : index
    %c0_170 = arith.constant 0 : index
    %309 = vector.load %arg7[%c1_168, %c0_169, %c0_170] : memref<2x1x32xf32, #tpu.memory_space<vmem>>, vector<1x1x32xf32>
    %310 = vector.shape_cast %309 : vector<1x1x32xf32> to vector<1x32xf32>
    %311 = vector.broadcast %310 : vector<1x32xf32> to vector<8x32xf32>
    %312 = arith.addf %308, %311 : vector<8x32xf32>
    %c1_171 = arith.constant 1 : index
    %c0_172 = arith.constant 0 : index
    %c0_173 = arith.constant 0 : index
    %313 = vector.load %arg8[%c1_171, %c0_172, %c0_173] : memref<2x1x32xf32, #tpu.memory_space<vmem>>, vector<1x1x32xf32>
    %314 = vector.shape_cast %313 : vector<1x1x32xf32> to vector<1x32xf32>
    %c1_174 = arith.constant 1 : index
    %c0_175 = arith.constant 0 : index
    %c0_176 = arith.constant 0 : index
    %315 = vector.load %arg9[%c1_174, %c0_175, %c0_176] : memref<2x1x32xf32, #tpu.memory_space<vmem>>, vector<1x1x32xf32>
    %316 = vector.shape_cast %315 : vector<1x1x32xf32> to vector<1x32xf32>
    %cst_177 = arith.constant dense<0.000000e+00> : vector<8xf32>
    %317 = vector.multi_reduction <add>, %312, %cst_177 [1] : vector<8x32xf32> to vector<8xf32>
    %318 = vector.shape_cast %317 : vector<8xf32> to vector<8x1xf32>
    %cst_178 = arith.constant 3.200000e+01 : f32
    %319 = vector.broadcast %cst_178 : f32 to vector<8x1xf32>
    %320 = arith.divf %318, %319 : vector<8x1xf32>
    %321 = vector.broadcast %320 : vector<8x1xf32> to vector<8x32xf32>
    %322 = arith.subf %312, %321 : vector<8x32xf32>
    %323 = arith.mulf %322, %322 : vector<8x32xf32>
    %cst_179 = arith.constant dense<0.000000e+00> : vector<8xf32>
    %324 = vector.multi_reduction <add>, %323, %cst_179 [1] : vector<8x32xf32> to vector<8xf32>
    %325 = vector.shape_cast %324 : vector<8xf32> to vector<8x1xf32>
    %cst_180 = arith.constant 3.200000e+01 : f32
    %326 = vector.broadcast %cst_180 : f32 to vector<8x1xf32>
    %327 = arith.divf %325, %326 : vector<8x1xf32>
    %cst_181 = arith.constant 9.99999974E-6 : f32
    %328 = vector.broadcast %cst_181 : f32 to vector<8x1xf32>
    %329 = arith.addf %327, %328 : vector<8x1xf32>
    %330 = math.rsqrt %329 : vector<8x1xf32>
    %331 = vector.broadcast %330 : vector<8x1xf32> to vector<8x32xf32>
    %332 = arith.mulf %322, %331 : vector<8x32xf32>
    %333 = vector.broadcast %314 : vector<1x32xf32> to vector<8x32xf32>
    %334 = arith.mulf %332, %333 : vector<8x32xf32>
    %335 = vector.broadcast %316 : vector<1x32xf32> to vector<8x32xf32>
    %336 = arith.addf %334, %335 : vector<8x32xf32>
    %337 = arith.truncf %336 : vector<8x32xf32> to vector<8x32xbf16>
    %c1_182 = arith.constant 1 : index
    %c0_183 = arith.constant 0 : index
    %c0_184 = arith.constant 0 : index
    %338 = vector.load %arg10[%c1_182, %c0_183, %c0_184] : memref<2x32x128xbf16, #tpu.memory_space<vmem>>, vector<1x32x128xbf16>
    %339 = vector.shape_cast %338 : vector<1x32x128xbf16> to vector<32x128xbf16>
    %cst_185 = arith.constant dense<0.000000e+00> : vector<8x128xf32>
    %340 = tpu.matmul %337, %339, %cst_185 {dimension_numbers = #tpu.dot_dimension_numbers<[1], [0], [0], [1], [0, 0, 1, 1], [], []>} : vector<8x32xbf16>, vector<32x128xbf16>, vector<8x128xf32> -> vector<8x128xf32>
    %c1_186 = arith.constant 1 : index
    %c0_187 = arith.constant 0 : index
    %c0_188 = arith.constant 0 : index
    %341 = vector.load %arg11[%c1_186, %c0_187, %c0_188] : memref<2x1x128xf32, #tpu.memory_space<vmem>>, vector<1x1x128xf32>
    %342 = vector.shape_cast %341 : vector<1x1x128xf32> to vector<1x128xf32>
    %343 = vector.broadcast %342 : vector<1x128xf32> to vector<8x128xf32>
    %344 = arith.addf %340, %343 : vector<8x128xf32>
    %cst_189 = arith.constant 0.000000e+00 : f32
    %345 = vector.broadcast %cst_189 : f32 to vector<8x128xf32>
    %346 = arith.maximumf %344, %345 : vector<8x128xf32>
    %347 = arith.truncf %346 : vector<8x128xf32> to vector<8x128xbf16>
    %c1_190 = arith.constant 1 : index
    %c0_191 = arith.constant 0 : index
    %c0_192 = arith.constant 0 : index
    %348 = vector.load %arg12[%c1_190, %c0_191, %c0_192] : memref<2x128x32xbf16, #tpu.memory_space<vmem>>, vector<1x128x32xbf16>
    %349 = vector.shape_cast %348 : vector<1x128x32xbf16> to vector<128x32xbf16>
    %cst_193 = arith.constant dense<0.000000e+00> : vector<8x32xf32>
    %350 = tpu.matmul %347, %349, %cst_193 {dimension_numbers = #tpu.dot_dimension_numbers<[1], [0], [0], [1], [0, 0, 1, 1], [], []>} : vector<8x128xbf16>, vector<128x32xbf16>, vector<8x32xf32> -> vector<8x32xf32>
    %351 = arith.addf %312, %350 : vector<8x32xf32>
    %c1_194 = arith.constant 1 : index
    %c0_195 = arith.constant 0 : index
    %c0_196 = arith.constant 0 : index
    %352 = vector.load %arg13[%c1_194, %c0_195, %c0_196] : memref<2x1x32xf32, #tpu.memory_space<vmem>>, vector<1x1x32xf32>
    %353 = vector.shape_cast %352 : vector<1x1x32xf32> to vector<1x32xf32>
    %354 = vector.broadcast %353 : vector<1x32xf32> to vector<8x32xf32>
    %355 = arith.addf %351, %354 : vector<8x32xf32>
    %c0_197 = arith.constant 0 : index
    %c0_198 = arith.constant 0 : index
    %356 = vector.load %arg14[%c0_197, %c0_198] : memref<1x32xf32, #tpu.memory_space<vmem>>, vector<1x32xf32>
    %c0_199 = arith.constant 0 : index
    %c0_200 = arith.constant 0 : index
    %357 = vector.load %arg15[%c0_199, %c0_200] : memref<1x32xf32, #tpu.memory_space<vmem>>, vector<1x32xf32>
    %cst_201 = arith.constant dense<0.000000e+00> : vector<8xf32>
    %358 = vector.multi_reduction <add>, %355, %cst_201 [1] : vector<8x32xf32> to vector<8xf32>
    %359 = vector.shape_cast %358 : vector<8xf32> to vector<8x1xf32>
    %cst_202 = arith.constant 3.200000e+01 : f32
    %360 = vector.broadcast %cst_202 : f32 to vector<8x1xf32>
    %361 = arith.divf %359, %360 : vector<8x1xf32>
    %362 = vector.broadcast %361 : vector<8x1xf32> to vector<8x32xf32>
    %363 = arith.subf %355, %362 : vector<8x32xf32>
    %364 = arith.mulf %363, %363 : vector<8x32xf32>
    %cst_203 = arith.constant dense<0.000000e+00> : vector<8xf32>
    %365 = vector.multi_reduction <add>, %364, %cst_203 [1] : vector<8x32xf32> to vector<8xf32>
    %366 = vector.shape_cast %365 : vector<8xf32> to vector<8x1xf32>
    %cst_204 = arith.constant 3.200000e+01 : f32
    %367 = vector.broadcast %cst_204 : f32 to vector<8x1xf32>
    %368 = arith.divf %366, %367 : vector<8x1xf32>
    %cst_205 = arith.constant 9.99999974E-6 : f32
    %369 = vector.broadcast %cst_205 : f32 to vector<8x1xf32>
    %370 = arith.addf %368, %369 : vector<8x1xf32>
    %371 = math.rsqrt %370 : vector<8x1xf32>
    %372 = vector.broadcast %371 : vector<8x1xf32> to vector<8x32xf32>
    %373 = arith.mulf %363, %372 : vector<8x32xf32>
    %374 = vector.broadcast %356 : vector<1x32xf32> to vector<8x32xf32>
    %375 = arith.mulf %373, %374 : vector<8x32xf32>
    %376 = vector.broadcast %357 : vector<1x32xf32> to vector<8x32xf32>
    %377 = arith.addf %375, %376 : vector<8x32xf32>
    %378 = arith.truncf %377 : vector<8x32xf32> to vector<8x32xbf16>
    %c0_206 = arith.constant 0 : index
    %c0_207 = arith.constant 0 : index
    %379 = vector.load %arg16[%c0_206, %c0_207] : memref<32x128xbf16, #tpu.memory_space<vmem>>, vector<32x128xbf16>
    %cst_208 = arith.constant dense<0.000000e+00> : vector<8x128xf32>
    %380 = tpu.matmul %378, %379, %cst_208 {dimension_numbers = #tpu.dot_dimension_numbers<[1], [0], [0], [1], [0, 0, 1, 1], [], []>} : vector<8x32xbf16>, vector<32x128xbf16>, vector<8x128xf32> -> vector<8x128xf32>
    %c0_209 = arith.constant 0 : index
    %c0_210 = arith.constant 0 : index
    %381 = vector.load %arg17[%c0_209, %c0_210] : memref<1x128xf32, #tpu.memory_space<vmem>>, vector<1x128xf32>
    %382 = vector.broadcast %381 : vector<1x128xf32> to vector<8x128xf32>
    %383 = arith.addf %380, %382 : vector<8x128xf32>
    %c0_211 = arith.constant 0 : index
    %c0_212 = arith.constant 0 : index
    %c0_213 = arith.constant 0 : index
    %384 = vector.load %arg18[%c0_211, %c0_212, %c0_213] : memref<1x8x128xf32, #tpu.memory_space<vmem>>, vector<1x8x128xf32>
    %385 = vector.shape_cast %384 : vector<1x8x128xf32> to vector<8x128xf32>
    %386 = vector.shape_cast %383 : vector<8x128xf32> to vector<1x8x128xf32>
    tpu.vector_store %arg18[%c0_211, %c0_212, %c0_213], %386 {strides = array<i32>} : memref<1x8x128xf32, #tpu.memory_space<vmem>>, vector<1x8x128xf32>,
    return
  }
  func.func @transform_0(%arg0: i32) -> (i32, i32, i32) {
    %c0_i32 = arith.constant 0 : i32
    %c0_i32_0 = arith.constant 0 : i32
    %c0_i32_1 = arith.constant 0 : i32
    return %arg0, %c0_i32, %c0_i32_0 : i32, i32, i32
  }
  func.func @transform_1(%arg0: i32) -> (i32, i32, i32) {
    %c0_i32 = arith.constant 0 : i32
    %c0_i32_0 = arith.constant 0 : i32
    %c0_i32_1 = arith.constant 0 : i32
    %c0_i32_2 = arith.constant 0 : i32
    return %c0_i32, %c0_i32_0, %c0_i32_1 : i32, i32, i32
  }
  func.func @transform_2(%arg0: i32) -> (i32, i32, i32) {
    %c0_i32 = arith.constant 0 : i32
    %c0_i32_0 = arith.constant 0 : i32
    %c0_i32_1 = arith.constant 0 : i32
    %c0_i32_2 = arith.constant 0 : i32
    return %c0_i32, %c0_i32_0, %c0_i32_1 : i32, i32, i32
  }
  func.func @transform_3(%arg0: i32) -> (i32, i32, i32) {
    %c0_i32 = arith.constant 0 : i32
    %c0_i32_0 = arith.constant 0 : i32
    %c0_i32_1 = arith.constant 0 : i32
    %c0_i32_2 = arith.constant 0 : i32
    return %c0_i32, %c0_i32_0, %c0_i32_1 : i32, i32, i32
  }
  func.func @transform_4(%arg0: i32) -> (i32, i32, i32) {
    %c0_i32 = arith.constant 0 : i32
    %c0_i32_0 = arith.constant 0 : i32
    %c0_i32_1 = arith.constant 0 : i32
    %c0_i32_2 = arith.constant 0 : i32
    return %c0_i32, %c0_i32_0, %c0_i32_1 : i32, i32, i32
  }
  func.func @transform_5(%arg0: i32) -> (i32, i32, i32) {
    %c0_i32 = arith.constant 0 : i32
    %c0_i32_0 = arith.constant 0 : i32
    %c0_i32_1 = arith.constant 0 : i32
    %c0_i32_2 = arith.constant 0 : i32
    return %c0_i32, %c0_i32_0, %c0_i32_1 : i32, i32, i32
  }
  func.func @transform_6(%arg0: i32) -> (i32, i32, i32) {
    %c0_i32 = arith.constant 0 : i32
    %c0_i32_0 = arith.constant 0 : i32
    %c0_i32_1 = arith.constant 0 : i32
    %c0_i32_2 = arith.constant 0 : i32
    return %c0_i32, %c0_i32_0, %c0_i32_1 : i32, i32, i32
  }
  func.func @transform_7(%arg0: i32) -> (i32, i32, i32) {
    %c0_i32 = arith.constant 0 : i32
    %c0_i32_0 = arith.constant 0 : i32
    %c0_i32_1 = arith.constant 0 : i32
    %c0_i32_2 = arith.constant 0 : i32
    return %c0_i32, %c0_i32_0, %c0_i32_1 : i32, i32, i32
  }
  func.func @transform_8(%arg0: i32) -> (i32, i32, i32) {
    %c0_i32 = arith.constant 0 : i32
    %c0_i32_0 = arith.constant 0 : i32
    %c0_i32_1 = arith.constant 0 : i32
    %c0_i32_2 = arith.constant 0 : i32
    return %c0_i32, %c0_i32_0, %c0_i32_1 : i32, i32, i32
  }
  func.func @transform_9(%arg0: i32) -> (i32, i32, i32) {
    %c0_i32 = arith.constant 0 : i32
    %c0_i32_0 = arith.constant 0 : i32
    %c0_i32_1 = arith.constant 0 : i32
    %c0_i32_2 = arith.constant 0 : i32
    return %c0_i32, %c0_i32_0, %c0_i32_1 : i32, i32, i32
  }
  func.func @transform_10(%arg0: i32) -> (i32, i32, i32) {
    %c0_i32 = arith.constant 0 : i32
    %c0_i32_0 = arith.constant 0 : i32
    %c0_i32_1 = arith.constant 0 : i32
    %c0_i32_2 = arith.constant 0 : i32
    return %c0_i32, %c0_i32_0, %c0_i32_1 : i32, i32, i32
  }
  func.func @transform_11(%arg0: i32) -> (i32, i32, i32) {
    %c0_i32 = arith.constant 0 : i32
    %c0_i32_0 = arith.constant 0 : i32
    %c0_i32_1 = arith.constant 0 : i32
    %c0_i32_2 = arith.constant 0 : i32
    return %c0_i32, %c0_i32_0, %c0_i32_1 : i32, i32, i32
  }
  func.func @transform_12(%arg0: i32) -> (i32, i32, i32) {
    %c0_i32 = arith.constant 0 : i32
    %c0_i32_0 = arith.constant 0 : i32
    %c0_i32_1 = arith.constant 0 : i32
    %c0_i32_2 = arith.constant 0 : i32
    return %c0_i32, %c0_i32_0, %c0_i32_1 : i32, i32, i32
  }
  func.func @transform_13(%arg0: i32) -> (i32, i32) {
    %c0_i32 = arith.constant 0 : i32
    %c0_i32_0 = arith.constant 0 : i32
    %c0_i32_1 = arith.constant 0 : i32
    return %c0_i32, %c0_i32_0 : i32, i32
  }
  func.func @transform_14(%arg0: i32) -> (i32, i32) {
    %c0_i32 = arith.constant 0 : i32
    %c0_i32_0 = arith.constant 0 : i32
    %c0_i32_1 = arith.constant 0 : i32
    return %c0_i32, %c0_i32_0 : i32, i32
  }
  func.func @transform_15(%arg0: i32) -> (i32, i32) {
    %c0_i32 = arith.constant 0 : i32
    %c0_i32_0 = arith.constant 0 : i32
    %c0_i32_1 = arith.constant 0 : i32
    return %c0_i32, %c0_i32_0 : i32, i32
  }
  func.func @transform_16(%arg0: i32) -> (i32, i32) {
    %c0_i32 = arith.constant 0 : i32
    %c0_i32_0 = arith.constant 0 : i32
    %c0_i32_1 = arith.constant 0 : i32
    return %c0_i32, %c0_i32_0 : i32, i32
  }
  func.func @transform_17(%arg0: i32) -> (i32, i32, i32) {
    %c0_i32 = arith.constant 0 : i32
    %c0_i32_0 = arith.constant 0 : i32
    %c0_i32_1 = arith.constant 0 : i32
    return %arg0, %c0_i32, %c0_i32_0 : i32, i32, i32
  }
}

</mosaic_0001>

<llo_original>
// kernel: transformer_forward.1
$region0: #{transformer_forward.1}
  #allocation0 [shape = 'u32[]', space=smem, size = 0x4, offset = 0x4, fixed_abs, tag = 'smem constant byte address 0x4 - core index']
  #allocation1 [shape = 'u32[72,128]{1,0:T(1,128)}', space=vmem, size = 0x9000, scoped, tag = 'internal scratch']
  #allocation2 [shape = 'f32[8,96]{1,0:T(8,128)}', space=vmem, size = 0x1000, scoped, tag = 'scratch operand']
  #allocation3 [shape = 'f32[8,32]{1,0:T(8,128)}', space=vmem, size = 0x1000, scoped, tag = 'scratch operand']
  %s0 = inlined_call_operand.vmem [shape: f32[2,8,32], index: 0, kind: input, shape index: {}]
  %s1 = inlined_call_operand.vmem [shape: f32[2,1,32], index: 1, kind: input, shape index: {}]
  %s2 = inlined_call_operand.vmem [shape: f32[2,1,32], index: 2, kind: input, shape index: {}]
  %s3 = inlined_call_operand.vmem [shape: bf16[2,32,96], index: 3, kind: input, shape index: {}]
  %s4 = inlined_call_operand.vmem [shape: f32[2,1,96], index: 4, kind: input, shape index: {}]
  %s5 = inlined_call_operand.vmem [shape: bf16[2,32,32], index: 5, kind: input, shape index: {}]
  %s6 = inlined_call_operand.vmem [shape: f32[2,1,32], index: 6, kind: input, shape index: {}]
  %s7 = inlined_call_operand.vmem [shape: f32[2,1,32], index: 7, kind: input, shape index: {}]
  %s8 = inlined_call_operand.vmem [shape: f32[2,1,32], index: 8, kind: input, shape index: {}]
  %s9 = inlined_call_operand.vmem [shape: bf16[2,32,128], index: 9, kind: input, shape index: {}]
  %s10 = inlined_call_operand.vmem [shape: f32[2,1,128], index: 10, kind: input, shape index: {}]
  %s11 = inlined_call_operand.vmem [shape: bf16[2,128,32], index: 11, kind: input, shape index: {}]
  %s12 = inlined_call_operand.vmem [shape: f32[2,1,32], index: 12, kind: input, shape index: {}]
  %s13 = inlined_call_operand.vmem [shape: f32[1,32], index: 13, kind: input, shape index: {}]
  %s14 = inlined_call_operand.vmem [shape: f32[1,32], index: 14, kind: input, shape index: {}]
  %s15 = inlined_call_operand.vmem [shape: bf16[32,128], index: 15, kind: input, shape index: {}]
  %s16 = inlined_call_operand.vmem [shape: f32[1,128], index: 16, kind: input, shape index: {}]
  %s17 = inlined_call_operand.hbm [shape: f32[2,8,128], index: 17, kind: output, shape index: {}]
  %s18 = sld [smem:[#allocation0]]
  $region101: #{transformer_forward.1} parent=0
    _
  %s20 = ssub.s32 1, %s18
  %s21 = scalar_select 0, %s20, %s18
  $region1: #{transformer_forward.1} parent=0
    #allocation4 [shape = 'u8[8192]{0}', space=vmem, size = 0x2000, scoped, tag = 'output window, operand 0']
    #allocation5 [shape = 's32[2]{0}', space=sflag, size = 0x8, scoped, tag = 'scoped memory for transformer_forward.1']
    %22 = vsyncpa [#allocation5], 0
    %s23 = scalar_lea.sflag [#allocation5], 1
    %24 = vsyncpa %s23, 0
    loop: start=0, step=1, limit=4
    $region2: #{transformer_forward.1} parent=1 // loop_pre_header
      _
    $region3: #{transformer_forward.1} parent=1 // loop_header
      %s26 = sphi 0, %s30
      %p27 = scmp.ge.s32.totalorder %s26, 4
      %s36 = sphi 0, %s38
      %s39 = sphi 0, %s36
      %s40 = sphi 0, %s39
      %s56 = sphi 0, %s40
      %s60 = sphi 0, %s60
      %s62 = sphi 0, %s60
      %s63 = sphi 0, %s62
      %s77 = sphi 0, %s63
      %s81 = sphi 0, %s81
      %s83 = sphi 0, %s81
      %s84 = sphi 0, %s83
      %s98 = sphi 0, %s84
      %s102 = sphi 0, %s102
      %s104 = sphi 0, %s102
      %s105 = sphi 0, %s104
      %s119 = sphi 0, %s105
      %s123 = sphi 0, %s123
      %s125 = sphi 0, %s123
      %s126 = sphi 0, %s125
      %s140 = sphi 0, %s126
      %s144 = sphi 0, %s144
      %s146 = sphi 0, %s144
      %s147 = sphi 0, %s146
      %s161 = sphi 0, %s147
      %s165 = sphi 0, %s165
      %s167 = sphi 0, %s165
      %s168 = sphi 0, %s167
      %s182 = sphi 0, %s168
      %s186 = sphi 0, %s186
      %s188 = sphi 0, %s186
      %s189 = sphi 0, %s188
      %s203 = sphi 0, %s189
      %s207 = sphi 0, %s207
      %s209 = sphi 0, %s207
      %s210 = sphi 0, %s209
      %s224 = sphi 0, %s210
      %s228 = sphi 0, %s228
      %s230 = sphi 0, %s228
      %s231 = sphi 0, %s230
      %s245 = sphi 0, %s231
      %s249 = sphi 0, %s249
      %s251 = sphi 0, %s249
      %s252 = sphi 0, %s251
      %s266 = sphi 0, %s252
      %s270 = sphi 0, %s270
      %s272 = sphi 0, %s270
      %s273 = sphi 0, %s272
      %s287 = sphi 0, %s273
      %s291 = sphi 0, %s291
      %s293 = sphi 0, %s291
      %s294 = sphi 0, %s293
      %s308 = sphi 0, %s294
      %s312 = sphi 0, %s312
      %s314 = sphi 0, %s312
      %s315 = sphi 0, %s314
      %s329 = sphi 0, %s315
      %s333 = sphi 0, %s333
      %s335 = sphi 0, %s333
      %s336 = sphi 0, %s335
      %s350 = sphi 0, %s336
      %s354 = sphi 0, %s354
      %s356 = sphi 0, %s354
      %s357 = sphi 0, %s356
      %s371 = sphi 0, %s357
      %s375 = sphi 0, %s375
      %s377 = sphi 0, %s375
      %s378 = sphi 0, %s377
      %s392 = sphi 0, %s378
      %s398 = sphi 0, %s400
      %s401 = sphi 0, %s398
      %s402 = sphi 0, %s401
      %s418 = sphi 0, %s402
    $region4: #{transformer_forward.1} parent=1 // loop_header_branch
      %29 = sbr.rel (%p27) target = $region8
    $region5: #{transformer_forward.1} parent=1 // loop_body
      %s31 = ssub.s32 %s26, 1
      %s32 = ssub.s32 %s26, 2
      %s33 = sadd.s32 %s26, 1
      %s34 = ssub.s32 %s26, %s33
      %p35 = scmp.eq.s32.totalorder %s34, 0
      %s37 = sadd.s32 %s36, 1
      %s38 = scalar_select %p35, %s36, %s37
      %p41 = pneg %p35
      %p42 = scmp.eq.s32.totalorder %s26, 1
      %p43 = por %p41, %p42
      %p44 = scmp.ne.s32.totalorder %s36, %s39
      %p45 = scmp.eq.s32.totalorder %s26, 0
      %p46 = por %p44, %p45
      %p47 = scmp.ne.s32.totalorder %s36, %s39
      %p48 = scmp.eq.s32.totalorder %s31, 1
      %p49 = por %p47, %p48
      %p50 = scmp.ne.s32.totalorder %s39, %s40
      %p51 = scmp.eq.s32.totalorder %s31, 0
      %p52 = por %p50, %p51
      %p53 = scmp.ne.s32.totalorder %s39, %s40
      %p54 = scmp.eq.s32.totalorder %s32, 1
      %p55 = por %p53, %p54
      %p57 = scmp.ne.s32.totalorder %s40, %s56
      %p58 = scmp.eq.s32.totalorder %s32, 0
      %p59 = por %p57, %p58
      %s61 = sadd.s32 %s60, 1
      %p64 = scmp.eq.s32.totalorder %s26, 1
      %p65 = scmp.ne.s32.totalorder %s60, %s62
      %p66 = scmp.eq.s32.totalorder %s26, 0
      %p67 = por %p65, %p66
      %p68 = scmp.ne.s32.totalorder %s60, %s62
      %p69 = scmp.eq.s32.totalorder %s31, 1
      %p70 = por %p68, %p69
      %p71 = scmp.ne.s32.totalorder %s62, %s63
      %p72 = scmp.eq.s32.totalorder %s31, 0
      %p73 = por %p71, %p72
      %p74 = scmp.ne.s32.totalorder %s62, %s63
      %p75 = scmp.eq.s32.totalorder %s32, 1
      %p76 = por %p74, %p75
      %p78 = scmp.ne.s32.totalorder %s63, %s77
      %p79 = scmp.eq.s32.totalorder %s32, 0
      %p80 = por %p78, %p79
      %s82 = sadd.s32 %s81, 1
      %p85 = scmp.eq.s32.totalorder %s26, 1
      %p86 = scmp.ne.s32.totalorder %s81, %s83
      %p87 = scmp.eq.s32.totalorder %s26, 0
      %p88 = por %p86, %p87
      %p89 = scmp.ne.s32.totalorder %s81, %s83
      %p90 = scmp.eq.s32.totalorder %s31, 1
      %p91 = por %p89, %p90
      %p92 = scmp.ne.s32.totalorder %s83, %s84
      %p93 = scmp.eq.s32.totalorder %s31, 0
      %p94 = por %p92, %p93
      %p95 = scmp.ne.s32.totalorder %s83, %s84
      %p96 = scmp.eq.s32.totalorder %s32, 1
      %p97 = por %p95, %p96
      %p99 = scmp.ne.s32.totalorder %s84, %s98
      %p100 = scmp.eq.s32.totalorder %s32, 0
      %p101 = por %p99, %p100
      %s103 = sadd.s32 %s102, 1
      %p106 = scmp.eq.s32.totalorder %s26, 1
      %p107 = scmp.ne.s32.totalorder %s102, %s104
      %p108 = scmp.eq.s32.totalorder %s26, 0
      %p109 = por %p107, %p108
      %p110 = scmp.ne.s32.totalorder %s102, %s104
      %p111 = scmp.eq.s32.totalorder %s31, 1
      %p112 = por %p110, %p111
      %p113 = scmp.ne.s32.totalorder %s104, %s105
      %p114 = scmp.eq.s32.totalorder %s31, 0
      %p115 = por %p113, %p114
      %p116 = scmp.ne.s32.totalorder %s104, %s105
      %p117 = scmp.eq.s32.totalorder %s32, 1
      %p118 = por %p116, %p117
      %p120 = scmp.ne.s32.totalorder %s105, %s119
      %p121 = scmp.eq.s32.totalorder %s32, 0
      %p122 = por %p120, %p121
      %s124 = sadd.s32 %s123, 1
      %p127 = scmp.eq.s32.totalorder %s26, 1
      %p128 = scmp.ne.s32.totalorder %s123, %s125
      %p129 = scmp.eq.s32.totalorder %s26, 0
      %p130 = por %p128, %p129
      %p131 = scmp.ne.s32.totalorder %s123, %s125
      %p132 = scmp.eq.s32.totalorder %s31, 1
      %p133 = por %p131, %p132
      %p134 = scmp.ne.s32.totalorder %s125, %s126
      %p135 = scmp.eq.s32.totalorder %s31, 0
      %p136 = por %p134, %p135
      %p137 = scmp.ne.s32.totalorder %s125, %s126
      %p138 = scmp.eq.s32.totalorder %s32, 1
      %p139 = por %p137, %p138
      %p141 = scmp.ne.s32.totalorder %s126, %s140
      %p142 = scmp.eq.s32.totalorder %s32, 0
      %p143 = por %p141, %p142
      %s145 = sadd.s32 %s144, 1
      %p148 = scmp.eq.s32.totalorder %s26, 1
      %p149 = scmp.ne.s32.totalorder %s144, %s146
      %p150 = scmp.eq.s32.totalorder %s26, 0
      %p151 = por %p149, %p150
      %p152 = scmp.ne.s32.totalorder %s144, %s146
      %p153 = scmp.eq.s32.totalorder %s31, 1
      %p154 = por %p152, %p153
      %p155 = scmp.ne.s32.totalorder %s146, %s147
      %p156 = scmp.eq.s32.totalorder %s31, 0
      %p157 = por %p155, %p156
      %p158 = scmp.ne.s32.totalorder %s146, %s147
      %p159 = scmp.eq.s32.totalorder %s32, 1
      %p160 = por %p158, %p159
      %p162 = scmp.ne.s32.totalorder %s147, %s161
      %p163 = scmp.eq.s32.totalorder %s32, 0
      %p164 = por %p162, %p163
      %s166 = sadd.s32 %s165, 1
      %p169 = scmp.eq.s32.totalorder %s26, 1
      %p170 = scmp.ne.s32.totalorder %s165, %s167
      %p171 = scmp.eq.s32.totalorder %s26, 0
      %p172 = por %p170, %p171
      %p173 = scmp.ne.s32.totalorder %s165, %s167
      %p174 = scmp.eq.s32.totalorder %s31, 1
      %p175 = por %p173, %p174
      %p176 = scmp.ne.s32.totalorder %s167, %s168
      %p177 = scmp.eq.s32.totalorder %s31, 0
      %p178 = por %p176, %p177
      %p179 = scmp.ne.s32.totalorder %s167, %s168
      %p180 = scmp.eq.s32.totalorder %s32, 1
      %p181 = por %p179, %p180
      %p183 = scmp.ne.s32.totalorder %s168, %s182
      %p184 = scmp.eq.s32.totalorder %s32, 0
      %p185 = por %p183, %p184
      %s187 = sadd.s32 %s186, 1
      %p190 = scmp.eq.s32.totalorder %s26, 1
      %p191 = scmp.ne.s32.totalorder %s186, %s188
      %p192 = scmp.eq.s32.totalorder %s26, 0
      %p193 = por %p191, %p192
      %p194 = scmp.ne.s32.totalorder %s186, %s188
      %p195 = scmp.eq.s32.totalorder %s31, 1
      %p196 = por %p194, %p195
      %p197 = scmp.ne.s32.totalorder %s188, %s189
      %p198 = scmp.eq.s32.totalorder %s31, 0
      %p199 = por %p197, %p198
      %p200 = scmp.ne.s32.totalorder %s188, %s189
      %p201 = scmp.eq.s32.totalorder %s32, 1
      %p202 = por %p200, %p201
      %p204 = scmp.ne.s32.totalorder %s189, %s203
      %p205 = scmp.eq.s32.totalorder %s32, 0
      %p206 = por %p204, %p205
      %s208 = sadd.s32 %s207, 1
      %p211 = scmp.eq.s32.totalorder %s26, 1
      %p212 = scmp.ne.s32.totalorder %s207, %s209
      %p213 = scmp.eq.s32.totalorder %s26, 0
      %p214 = por %p212, %p213
      %p215 = scmp.ne.s32.totalorder %s207, %s209
      %p216 = scmp.eq.s32.totalorder %s31, 1
      %p217 = por %p215, %p216
      %p218 = scmp.ne.s32.totalorder %s209, %s210
      %p219 = scmp.eq.s32.totalorder %s31, 0
      %p220 = por %p218, %p219
      %p221 = scmp.ne.s32.totalorder %s209, %s210
      %p222 = scmp.eq.s32.totalorder %s32, 1
      %p223 = por %p221, %p222
      %p225 = scmp.ne.s32.totalorder %s210, %s224
      %p226 = scmp.eq.s32.totalorder %s32, 0
      %p227 = por %p225, %p226
      %s229 = sadd.s32 %s228, 1
      %p232 = scmp.eq.s32.totalorder %s26, 1
      %p233 = scmp.ne.s32.totalorder %s228, %s230
      %p234 = scmp.eq.s32.totalorder %s26, 0
      %p235 = por %p233, %p234
      %p236 = scmp.ne.s32.totalorder %s228, %s230
      %p237 = scmp.eq.s32.totalorder %s31, 1
      %p238 = por %p236, %p237
      %p239 = scmp.ne.s32.totalorder %s230, %s231
      %p240 = scmp.eq.s32.totalorder %s31, 0
      %p241 = por %p239, %p240
      %p242 = scmp.ne.s32.totalorder %s230, %s231
      %p243 = scmp.eq.s32.totalorder %s32, 1
      %p244 = por %p242, %p243
      %p246 = scmp.ne.s32.totalorder %s231, %s245
      %p247 = scmp.eq.s32.totalorder %s32, 0
      %p248 = por %p246, %p247
      %s250 = sadd.s32 %s249, 1
      %p253 = scmp.eq.s32.totalorder %s26, 1
      %p254 = scmp.ne.s32.totalorder %s249, %s251
      %p255 = scmp.eq.s32.totalorder %s26, 0
      %p256 = por %p254, %p255
      %p257 = scmp.ne.s32.totalorder %s249, %s251
      %p258 = scmp.eq.s32.totalorder %s31, 1
      %p259 = por %p257, %p258
      %p260 = scmp.ne.s32.totalorder %s251, %s252
      %p261 = scmp.eq.s32.totalorder %s31, 0
      %p262 = por %p260, %p261
      %p263 = scmp.ne.s32.totalorder %s251, %s252
      %p264 = scmp.eq.s32.totalorder %s32, 1
      %p265 = por %p263, %p264
      %p267 = scmp.ne.s32.totalorder %s252, %s266
      %p268 = scmp.eq.s32.totalorder %s32, 0
      %p269 = por %p267, %p268
      %s271 = sadd.s32 %s270, 1
      %p274 = scmp.eq.s32.totalorder %s26, 1
      %p275 = scmp.ne.s32.totalorder %s270, %s272
      %p276 = scmp.eq.s32.totalorder %s26, 0
      %p277 = por %p275, %p276
      %p278 = scmp.ne.s32.totalorder %s270, %s272
      %p279 = scmp.eq.s32.totalorder %s31, 1
      %p280 = por %p278, %p279
      %p281 = scmp.ne.s32.totalorder %s272, %s273
      %p282 = scmp.eq.s32.totalorder %s31, 0
      %p283 = por %p281, %p282
      %p284 = scmp.ne.s32.totalorder %s272, %s273
      %p285 = scmp.eq.s32.totalorder %s32, 1
      %p286 = por %p284, %p285
      %p288 = scmp.ne.s32.totalorder %s273, %s287
      %p289 = scmp.eq.s32.totalorder %s32, 0
      %p290 = por %p288, %p289
      %s292 = sadd.s32 %s291, 1
      %p295 = scmp.eq.s32.totalorder %s26, 1
      %p296 = scmp.ne.s32.totalorder %s291, %s293
      %p297 = scmp.eq.s32.totalorder %s26, 0
      %p298 = por %p296, %p297
      %p299 = scmp.ne.s32.totalorder %s291, %s293
      %p300 = scmp.eq.s32.totalorder %s31, 1
      %p301 = por %p299, %p300
      %p302 = scmp.ne.s32.totalorder %s293, %s294
      %p303 = scmp.eq.s32.totalorder %s31, 0
      %p304 = por %p302, %p303
      %p305 = scmp.ne.s32.totalorder %s293, %s294
      %p306 = scmp.eq.s32.totalorder %s32, 1
      %p307 = por %p305, %p306
      %p309 = scmp.ne.s32.totalorder %s294, %s308
      %p310 = scmp.eq.s32.totalorder %s32, 0
      %p311 = por %p309, %p310
      %s313 = sadd.s32 %s312, 1
      %p316 = scmp.eq.s32.totalorder %s26, 1
      %p317 = scmp.ne.s32.totalorder %s312, %s314
      %p318 = scmp.eq.s32.totalorder %s26, 0
      %p319 = por %p317, %p318
      %p320 = scmp.ne.s32.totalorder %s312, %s314
      %p321 = scmp.eq.s32.totalorder %s31, 1
      %p322 = por %p320, %p321
      %p323 = scmp.ne.s32.totalorder %s314, %s315
      %p324 = scmp.eq.s32.totalorder %s31, 0
      %p325 = por %p323, %p324
      %p326 = scmp.ne.s32.totalorder %s314, %s315
      %p327 = scmp.eq.s32.totalorder %s32, 1
      %p328 = por %p326, %p327
      %p330 = scmp.ne.s32.totalorder %s315, %s329
      %p331 = scmp.eq.s32.totalorder %s32, 0
      %p332 = por %p330, %p331
      %s334 = sadd.s32 %s333, 1
      %p337 = scmp.eq.s32.totalorder %s26, 1
      %p338 = scmp.ne.s32.totalorder %s333, %s335
      %p339 = scmp.eq.s32.totalorder %s26, 0
      %p340 = por %p338, %p339
      %p341 = scmp.ne.s32.totalorder %s333, %s335
      %p342 = scmp.eq.s32.totalorder %s31, 1
      %p343 = por %p341, %p342
      %p344 = scmp.ne.s32.totalorder %s335, %s336
      %p345 = scmp.eq.s32.totalorder %s31, 0
      %p346 = por %p344, %p345
      %p347 = scmp.ne.s32.totalorder %s335, %s336
      %p348 = scmp.eq.s32.totalorder %s32, 1
      %p349 = por %p347, %p348
      %p351 = scmp.ne.s32.totalorder %s336, %s350
      %p352 = scmp.eq.s32.totalorder %s32, 0
      %p353 = por %p351, %p352
      %s355 = sadd.s32 %s354, 1
      %p358 = scmp.eq.s32.totalorder %s26, 1
      %p359 = scmp.ne.s32.totalorder %s354, %s356
      %p360 = scmp.eq.s32.totalorder %s26, 0
      %p361 = por %p359, %p360
      %p362 = scmp.ne.s32.totalorder %s354, %s356
      %p363 = scmp.eq.s32.totalorder %s31, 1
      %p364 = por %p362, %p363
      %p365 = scmp.ne.s32.totalorder %s356, %s357
      %p366 = scmp.eq.s32.totalorder %s31, 0
      %p367 = por %p365, %p366
      %p368 = scmp.ne.s32.totalorder %s356, %s357
      %p369 = scmp.eq.s32.totalorder %s32, 1
      %p370 = por %p368, %p369
      %p372 = scmp.ne.s32.totalorder %s357, %s371
      %p373 = scmp.eq.s32.totalorder %s32, 0
      %p374 = por %p372, %p373
      %s376 = sadd.s32 %s375, 1
      %p379 = scmp.eq.s32.totalorder %s26, 1
      %p380 = scmp.ne.s32.totalorder %s375, %s377
      %p381 = scmp.eq.s32.totalorder %s26, 0
      %p382 = por %p380, %p381
      %p383 = scmp.ne.s32.totalorder %s375, %s377
      %p384 = scmp.eq.s32.totalorder %s31, 1
      %p385 = por %p383, %p384
      %p386 = scmp.ne.s32.totalorder %s377, %s378
      %p387 = scmp.eq.s32.totalorder %s31, 0
      %p388 = por %p386, %p387
      %p389 = scmp.ne.s32.totalorder %s377, %s378
      %p390 = scmp.eq.s32.totalorder %s32, 1
      %p391 = por %p389, %p390
      %p393 = scmp.ne.s32.totalorder %s378, %s392
      %p394 = scmp.eq.s32.totalorder %s32, 0
      %p395 = por %p393, %p394
      %s396 = ssub.s32 %s26, %s33
      %p397 = scmp.eq.s32.totalorder %s396, 0
      %s399 = sadd.s32 %s398, 1
      %s400 = scalar_select %p397, %s398, %s399
      %p403 = pneg %p397
      %p404 = scmp.eq.s32.totalorder %s26, 1
      %p405 = por %p403, %p404
      %p406 = scmp.ne.s32.totalorder %s398, %s401
      %p407 = scmp.eq.s32.totalorder %s26, 0
      %p408 = por %p406, %p407
      %p409 = scmp.ne.s32.totalorder %s398, %s401
      %p410 = scmp.eq.s32.totalorder %s31, 1
      %p411 = por %p409, %p410
      %p412 = scmp.ne.s32.totalorder %s401, %s402
      %p413 = scmp.eq.s32.totalorder %s31, 0
      %p414 = por %p412, %p413
      %p415 = scmp.ne.s32.totalorder %s401, %s402
      %p416 = scmp.eq.s32.totalorder %s32, 1
      %p417 = por %p415, %p416
      %p419 = scmp.ne.s32.totalorder %s402, %s418
      %p420 = scmp.eq.s32.totalorder %s32, 0
      %p421 = por %p419, %p420
      %p422 = scmp.le.s32.totalorder 1, %s26
      %p423 = scmp.lt.s32.totalorder %s26, 3
      %p424 = pnand %p422, %p423
      %p425 = pneg %p424
      // Predicated region
      $region9: #{transformer_forward.1} parent=5 // pred_check
        _
      $region10: #{transformer_forward.1} parent=5 // pred_check_branch
        %427 = sbr.rel (%p424) target = $region12
      $region11: #{transformer_forward.1} parent=5 // pred_region
        %s428 = ssub.s32 %s26, 1
        // Predicated region
        $region13: #{transformer_forward.1} parent=11 // pred_check
          %p429 = pneg %p73
        $region14: #{transformer_forward.1} parent=11 // pred_check_branch
          %431 = sbr.rel (%p429) target = $region16
        $region15: #{transformer_forward.1} parent=11 // pred_region
          _
        $region16: #{transformer_forward.1} parent=11 // pred_fallthru
          _
        // Predicated region
        $region17: #{transformer_forward.1} parent=11 // pred_check
          %p432 = pneg %p94
        $region18: #{transformer_forward.1} parent=11 // pred_check_branch
          %434 = sbr.rel (%p432) target = $region20
        $region19: #{transformer_forward.1} parent=11 // pred_region
          _
        $region20: #{transformer_forward.1} parent=11 // pred_fallthru
          _
        // Predicated region
        $region21: #{transformer_forward.1} parent=11 // pred_check
          %p435 = pneg %p115
        $region22: #{transformer_forward.1} parent=11 // pred_check_branch
          %437 = sbr.rel (%p435) target = $region24
        $region23: #{transformer_forward.1} parent=11 // pred_region
          _
        $region24: #{transformer_forward.1} parent=11 // pred_fallthru
          _
        // Predicated region
        $region25: #{transformer_forward.1} parent=11 // pred_check
          %p438 = pneg %p136
        $region26: #{transformer_forward.1} parent=11 // pred_check_branch
          %440 = sbr.rel (%p438) target = $region28
        $region27: #{transformer_forward.1} parent=11 // pred_region
          _
        $region28: #{transformer_forward.1} parent=11 // pred_fallthru
          _
        // Predicated region
        $region29: #{transformer_forward.1} parent=11 // pred_check
          %p441 = pneg %p157
        $region30: #{transformer_forward.1} parent=11 // pred_check_branch
          %443 = sbr.rel (%p441) target = $region32
        $region31: #{transformer_forward.1} parent=11 // pred_region
          _
        $region32: #{transformer_forward.1} parent=11 // pred_fallthru
          _
        // Predicated region
        $region33: #{transformer_forward.1} parent=11 // pred_check
          %p444 = pneg %p178
        $region34: #{transformer_forward.1} parent=11 // pred_check_branch
          %446 = sbr.rel (%p444) target = $region36
        $region35: #{transformer_forward.1} parent=11 // pred_region
          _
        $region36: #{transformer_forward.1} parent=11 // pred_fallthru
          _
        // Predicated region
        $region37: #{transformer_forward.1} parent=11 // pred_check
          %p447 = pneg %p199
        $region38: #{transformer_forward.1} parent=11 // pred_check_branch
          %449 = sbr.rel (%p447) target = $region40
        $region39: #{transformer_forward.1} parent=11 // pred_region
          _
        $region40: #{transformer_forward.1} parent=11 // pred_fallthru
          _
        // Predicated region
        $region41: #{transformer_forward.1} parent=11 // pred_check
          %p450 = pneg %p220
        $region42: #{transformer_forward.1} parent=11 // pred_check_branch
          %452 = sbr.rel (%p450) target = $region44
        $region43: #{transformer_forward.1} parent=11 // pred_region
          _
        $region44: #{transformer_forward.1} parent=11 // pred_fallthru
          _
        // Predicated region
        $region45: #{transformer_forward.1} parent=11 // pred_check
          %p453 = pneg %p241
        $region46: #{transformer_forward.1} parent=11 // pred_check_branch
          %455 = sbr.rel (%p453) target = $region48
        $region47: #{transformer_forward.1} parent=11 // pred_region
          _
        $region48: #{transformer_forward.1} parent=11 // pred_fallthru
          _
        // Predicated region
        $region49: #{transformer_forward.1} parent=11 // pred_check
          %p456 = pneg %p262
        $region50: #{transformer_forward.1} parent=11 // pred_check_branch
          %458 = sbr.rel (%p456) target = $region52
        $region51: #{transformer_forward.1} parent=11 // pred_region
          _
        $region52: #{transformer_forward.1} parent=11 // pred_fallthru
          _
        // Predicated region
        $region53: #{transformer_forward.1} parent=11 // pred_check
          %p459 = pneg %p283
        $region54: #{transformer_forward.1} parent=11 // pred_check_branch
          %461 = sbr.rel (%p459) target = $region56
        $region55: #{transformer_forward.1} parent=11 // pred_region
          _
        $region56: #{transformer_forward.1} parent=11 // pred_fallthru
          _
        // Predicated region
        $region57: #{transformer_forward.1} parent=11 // pred_check
          %p462 = pneg %p304
        $region58: #{transformer_forward.1} parent=11 // pred_check_branch
          %464 = sbr.rel (%p462) target = $region60
        $region59: #{transformer_forward.1} parent=11 // pred_region
          _
        $region60: #{transformer_forward.1} parent=11 // pred_fallthru
          _
        // Predicated region
        $region61: #{transformer_forward.1} parent=11 // pred_check
          %p465 = pneg %p325
        $region62: #{transformer_forward.1} parent=11 // pred_check_branch
          %467 = sbr.rel (%p465) target = $region64
        $region63: #{transformer_forward.1} parent=11 // pred_region
          _
        $region64: #{transformer_forward.1} parent=11 // pred_fallthru
          _
        // Predicated region
        $region65: #{transformer_forward.1} parent=11 // pred_check
          %p468 = pneg %p346
        $region66: #{transformer_forward.1} parent=11 // pred_check_branch
          %470 = sbr.rel (%p468) target = $region68
        $region67: #{transformer_forward.1} parent=11 // pred_region
          _
        $region68: #{transformer_forward.1} parent=11 // pred_fallthru
          _
        // Predicated region
        $region69: #{transformer_forward.1} parent=11 // pred_check
          %p471 = pneg %p367
        $region70: #{transformer_forward.1} parent=11 // pred_check_branch
          %473 = sbr.rel (%p471) target = $region72
        $region71: #{transformer_forward.1} parent=11 // pred_region
          _
        $region72: #{transformer_forward.1} parent=11 // pred_fallthru
          _
        // Predicated region
        $region73: #{transformer_forward.1} parent=11 // pred_check
          %p474 = pneg %p388
        $region74: #{transformer_forward.1} parent=11 // pred_check_branch
          %476 = sbr.rel (%p474) target = $region76
        $region75: #{transformer_forward.1} parent=11 // pred_region
          _
        $region76: #{transformer_forward.1} parent=11 // pred_fallthru
          _
      $region12: #{transformer_forward.1} parent=5 // pred_fallthru
        _
      %p477 = scmp.lt.s32.totalorder %s26, 2
      // Predicated region
      $region77: #{transformer_forward.1} parent=5 // pred_check
        %p478 = pneg %p477
      $region78: #{transformer_forward.1} parent=5 // pred_check_branch
        %480 = sbr.rel (%p478) target = $region80
      $region79: #{transformer_forward.1} parent=5 // pred_region
        // Predicated region
        $region81: #{transformer_forward.1} parent=79 // pred_check
          %p481 = pneg %p46
        $region82: #{transformer_forward.1} parent=79 // pred_check_branch
          %483 = sbr.rel (%p481) target = $region84
        $region83: #{transformer_forward.1} parent=79 // pred_region
          %p484 = scmp.lt.s32.totalorder %s26, 1
          %s485 = scalar_select %p484, %s26, 1
          %s486 = smul.addr %s485, 8
          %s487 = scalar_lea.vmem %s0, %s486
        $region84: #{transformer_forward.1} parent=79 // pred_fallthru
          _
      $region80: #{transformer_forward.1} parent=5 // pred_fallthru
        _
      %p488 = scmp.le.s32.totalorder 1, %s26
      %p489 = scmp.lt.s32.totalorder %s26, 3
      %p490 = pnand %p488, %p489
      %p491 = pneg %p490
      // Predicated region
      $region85: #{transformer_forward.1} parent=5 // pred_check
        _
      $region86: #{transformer_forward.1} parent=5 // pred_check_branch
        %493 = sbr.rel (%p490) target = $region88
      $region87: #{transformer_forward.1} parent=5 // pred_region
        %s494 = ssub.s32 %s26, 1
        %p495 = scmp.lt.s32.totalorder %s31, 1
        %s496 = scalar_select %p495, %s31, 1
        %s497 = smul.addr %s496, 8
        %s498 = scalar_lea.vmem %s0, %s497
        %p499 = pneg %p52
        %p500 = pneg %p49
        %p501 = pneg %p73
        %p502 = pneg %p70
        %p503 = pneg %p94
        %p504 = pneg %p91
        %p505 = pneg %p115
        %p506 = pneg %p112
        %p507 = pneg %p136
        %p508 = pneg %p133
        %p509 = pneg %p157
        %p510 = pneg %p154
        %p511 = pneg %p178
        %p512 = pneg %p175
        %p513 = pneg %p199
        %p514 = pneg %p196
        %p515 = pneg %p220
        %p516 = pneg %p217
        %p517 = pneg %p241
        %p518 = pneg %p238
        %p519 = pneg %p262
        %p520 = pneg %p259
        %p521 = pneg %p283
        %p522 = pneg %p280
        %p523 = pneg %p304
        %p524 = pneg %p301
        %p525 = pneg %p325
        %p526 = pneg %p322
        %p527 = pneg %p346
        %p528 = pneg %p343
        %p529 = pneg %p367
        %p530 = pneg %p364
        %p531 = pneg %p388
        %p532 = pneg %p385
        %p533 = pneg %p414
        %p534 = pneg %p411
        %s535 = sand.u32 %s401, 1
        %s536 = scalar_lea.sflag [#allocation5], %s535
        %s537 = sand.u32 %s401, 1
        %s538 = smul.addr %s537, 8
        %s539 = scalar_lea.vmem [#allocation4], %s538
        %p540 = scmp.lt.s32.totalorder %s31, 1
        %s541 = scalar_select %p540, %s31, 1
        %s542 = smul.addr %s541, 8
        %s543 = scalar_lea.vmem %s0, %s542
        %v545 = vld [vmem:[%s543] sm:$0xff]
        %v546 = vlaneseq
        %v547 = vshrl.u32 %v546, 7
        %v548 = vlaneseq
        %v549 = vand.u32 %v548, 127
        %vm550 = vcmp.le.s32.totalorder %v549, %v547
        %v551 = vsel %vm550, 0.0, -1e+30
        %v552 = vld [vmem:[%s1] sm:$0x1]
        %v553 = vld [vmem:[%s2] sm:$0x1]
        %vm554 = vcmask 261120
        %v555 = vsel %vm554, %v545, 0.0
        %556 = vadd.xlane.f32.xlu0 %v555
        %v557 = vpop.xlane.xlu0 %556
        %v558 = vrcp.pop 32.0
        %v559 = vmul.f32 32.0, %v558
        %v560 = vsub.f32 1.0, %v559
        %v561 = vmul.f32 %v558, %v560
        %v562 = vadd.f32 %v558, %v561
        %vm563 = vweird.f32 %v558
        %v564 = vsel %vm563, %v558, %v562
        %v565 = vmul.f32 %v557, %v564
        %v566 = vsub.f32 %v545, %v565
        %v567 = vmul.f32 %v566, %v566
        %v568 = vsel %vm554, %v567, 0.0
        %569 = vadd.xlane.f32.xlu0 %v568
        %v570 = vpop.xlane.xlu0 %569
        %v571 = vmul.f32 %v570, %v564
        %v572 = vadd.f32 %v571, 1e-05
        %v573 = vrsqrt.pop %v572
        %v574 = vmul.f32 %v573, %v572
        %v575 = vmul.f32 %v574, %v573
        %v576 = vmul.f32 0.5, %v575
        %v577 = vsub.f32 1.5, %v576
        %v578 = vmul.f32 %v573, %v577
        %vm579 = vweird.f32 %v572
        %vm580 = vweird.f32 %v573
        %vm581 = vmor %vm579, %vm580
        %v582 = vsel %vm581, %v573, %v578
        %v583 = vmul.f32 %v566, %v582
        %v585 = vperm.slane %v552, 0
        %v587 = vmul.f32 %v583, %v585
        %v589 = vperm.slane %v553, 0
        %v591 = vadd.f32 %v587, %v589
        %v592 = vpack.c.bf16 %v591, %v591
        %v593 = vld [vmem:[%s3] sm:$0xf]
        %v594 = vld [vmem:[%s3 + $0x4] sm:$0xf]
        %v595 = vld [vmem:[%s3 + $0x8] sm:$0xf]
        %v596 = vld [vmem:[%s3 + $0xc] sm:$0xf]
        %v597 = vld [vmem:[%s4] sm:$0x1]
        %v599 = vperm.slane %v597, 0
        %v605 = vunpack.c.l.b16 %v593
        %v606 = vunpack.c.l.b16 %v594
        %v607 = vunpack.c.l.b16 %v595
        %v608 = vunpack.c.l.b16 %v596
        %v609 = vpack.c.b16 %v606, %v605
        %v610 = vpack.c.b16 %v608, %v607
        %v614 = vsel %vm554, %v592, 0
        %616 = vmatpush.bf16.msra.mxu0 0
        %617 = vmatpush.bf16.msra.mxu0 0
        %618 = vmatpush.bf16.msra.mxu0 0
        %619 = vmatpush.bf16.msra.mxu0 0
        %620 = vmatpush.bf16.msra.mxu0 0
        %621 = vmatpush.bf16.msra.mxu0 0
        %622 = vmatpush.bf16.msra.mxu0 %v610
        %623 = vmatpush.bf16.msra.mxu0 %v609
        %624 = vmatmul.bf16.gmra.mxu0 %v614
        %v625 = vpop.f32.mrf.mxu0
        %v626 = vadd.f32 %v599, %v625
        %v627 = vpop.f32.mrf.mxu0
        %628 = vdwg.mxu0
        %vm629 = vcmask 785408
        %630 = vst.msk [vmem:[#allocation2] sm:$0xff] %vm629, %v626
        %v631 = vld [vmem:[#allocation2] sm:$0xff]
        %v632 = vpack.c.bf16 %v631, %v631
        %634 = vrot.lane.b32.xlu0 %v632, 96
        %v635 = vpop.permute.xlu0 %634
        %vm636 = vcmask 64512
        %v638 = vsel %vm636, %v632, 0
        %v641 = vsel %vm636, %v635, 0
        %643 = vmatpush.bf16.xpose.msra.mxu0 0
        %644 = vmatpush.bf16.xpose.msra.mxu0 0
        %645 = vmatpush.bf16.xpose.msra.mxu0 0
        %646 = vmatpush.bf16.xpose.msra.mxu0 0
        %647 = vmatpush.bf16.xpose.msra.mxu0 0
        %648 = vmatpush.bf16.xpose.msra.mxu0 0
        %649 = vmatpush.bf16.xpose.msra.mxu0 0
        %650 = vmatpush.bf16.xpose.msra.mxu0 %v641
        %651 = vmatmul.bf16.gmra.mxu0 %v638
        %v652 = vpop.f32.mrf.mxu0
        %v653 = vadd.f32 %v551, %v652
        %v654 = vpop.f32.mrf.mxu0
        %655 = vdwg.mxu0
        %v656 = vsel %vm636, %v653, -inf
        %657 = vmax.xlane.f32.xlu0 %v656
        %v658 = vpop.xlane.xlu0 %657
        %v659 = vsub.f32 %v653, %v658
        %v660 = vmul.f32 %v659, 1.442695
        %v661 = vpow.pop %v660
        %v662 = vsel %vm636, %v661, 0.0
        %663 = vadd.xlane.f32.xlu0 %v662
        %v664 = vpop.xlane.xlu0 %663
        %v665 = vrcp.pop %v664
        %v666 = vmul.f32 %v661, %v665
        %v667 = vpack.c.bf16 %v666, %v666
        %668 = vrot.lane.b32.xlu0 %v632, 64
        %v669 = vpop.permute.xlu0 %668
        %v671 = vsel %vm636, %v667, 0
        %vm673 = vcmask 1043456
        %v675 = vsel %vm673, %v669, 0
        %677 = vmatpush.bf16.msra.mxu0 0
        %678 = vmatpush.bf16.msra.mxu0 0
        %679 = vmatpush.bf16.msra.mxu0 0
        %680 = vmatpush.bf16.msra.mxu0 0
        %681 = vmatpush.bf16.msra.mxu0 0
        %682 = vmatpush.bf16.msra.mxu0 0
        %683 = vmatpush.bf16.msra.mxu0 0
        %684 = vmatpush.bf16.msra.mxu0 %v675
        %685 = vmatmul.bf16.gmra.mxu0 %v671
        %v686 = vpop.f32.mrf.mxu0
        %v687 = vadd.f32 0.0, %v686
        %v688 = vpop.f32.mrf.mxu0
        %689 = vdwg.mxu0
        %690 = vst.msk [vmem:[#allocation3] sm:$0xff] %vm636, %v687
        %v691 = vld [vmem:[#allocation2] sm:$0xff]
        %v692 = vpack.c.bf16 %v691, %v691
        %694 = vrot.lane.b32.xlu0 %v692, 120
        %v695 = vpop.permute.xlu0 %694
        %696 = vrot.lane.b32.xlu0 %v692, 88
        %v697 = vpop.permute.xlu0 %696
        %v699 = vsel %vm636, %v695, 0
        %v702 = vsel %vm636, %v697, 0
        %704 = vmatpush.bf16.xpose.msra.mxu0 0
        %705 = vmatpush.bf16.xpose.msra.mxu0 0
        %706 = vmatpush.bf16.xpose.msra.mxu0 0
        %707 = vmatpush.bf16.xpose.msra.mxu0 0
        %708 = vmatpush.bf16.xpose.msra.mxu0 0
        %709 = vmatpush.bf16.xpose.msra.mxu0 0
        %710 = vmatpush.bf16.xpose.msra.mxu0 0
        %711 = vmatpush.bf16.xpose.msra.mxu0 %v702
        %712 = vmatmul.bf16.gmra.mxu0 %v699
        %v713 = vpop.f32.mrf.mxu0
        %v714 = vadd.f32 %v551, %v713
        %v715 = vpop.f32.mrf.mxu0
        %716 = vdwg.mxu0
        %v717 = vsel %vm636, %v714, -inf
        %718 = vmax.xlane.f32.xlu0 %v717
        %v719 = vpop.xlane.xlu0 %718
        %v720 = vsub.f32 %v714, %v719
        %v721 = vmul.f32 %v720, 1.442695
        %v722 = vpow.pop %v721
        %v723 = vsel %vm636, %v722, 0.0
        %724 = vadd.xlane.f32.xlu0 %v723
        %v725 = vpop.xlane.xlu0 %724
        %v726 = vrcp.pop %v725
        %v727 = vmul.f32 %v722, %v726
        %v728 = vpack.c.bf16 %v727, %v727
        %729 = vrot.lane.b32.xlu0 %v692, 56
        %v730 = vpop.permute.xlu0 %729
        %v732 = vsel %vm636, %v728, 0
        %v735 = vsel %vm673, %v730, 0
        %737 = vmatpush.bf16.msra.mxu0 0
        %738 = vmatpush.bf16.msra.mxu0 0
        %739 = vmatpush.bf16.msra.mxu0 0
        %740 = vmatpush.bf16.msra.mxu0 0
        %741 = vmatpush.bf16.msra.mxu0 0
        %742 = vmatpush.bf16.msra.mxu0 0
        %743 = vmatpush.bf16.msra.mxu0 0
        %744 = vmatpush.bf16.msra.mxu0 %v735
        %745 = vmatmul.bf16.gmra.mxu0 %v732
        %v746 = vpop.f32.mrf.mxu0
        %v747 = vadd.f32 0.0, %v746
        %v748 = vpop.f32.mrf.mxu0
        %749 = vdwg.mxu0
        %751 = vrot.lane.b32.xlu0 %v747, 8
        %v752 = vpop.permute.xlu0 %751
        %vm754 = vcmask 130112
        %755 = vst.msk [vmem:[#allocation3] sm:$0xff] %vm754, %v752
        %v756 = vld [vmem:[#allocation2] sm:$0xff]
        %v757 = vpack.c.bf16 %v756, %v756
        %759 = vrot.lane.b32.xlu0 %v757, 112
        %v760 = vpop.permute.xlu0 %759
        %761 = vrot.lane.b32.xlu0 %v757, 80
        %v762 = vpop.permute.xlu0 %761
        %v764 = vsel %vm636, %v760, 0
        %v767 = vsel %vm636, %v762, 0
        %769 = vmatpush.bf16.xpose.msra.mxu0 0
        %770 = vmatpush.bf16.xpose.msra.mxu0 0
        %771 = vmatpush.bf16.xpose.msra.mxu0 0
        %772 = vmatpush.bf16.xpose.msra.mxu0 0
        %773 = vmatpush.bf16.xpose.msra.mxu0 0
        %774 = vmatpush.bf16.xpose.msra.mxu0 0
        %775 = vmatpush.bf16.xpose.msra.mxu0 0
        %776 = vmatpush.bf16.xpose.msra.mxu0 %v767
        %777 = vmatmul.bf16.gmra.mxu0 %v764
        %v778 = vpop.f32.mrf.mxu0
        %v779 = vadd.f32 %v551, %v778
        %v780 = vpop.f32.mrf.mxu0
        %781 = vdwg.mxu0
        %v782 = vsel %vm636, %v779, -inf
        %783 = vmax.xlane.f32.xlu0 %v782
        %v784 = vpop.xlane.xlu0 %783
        %v785 = vsub.f32 %v779, %v784
        %v786 = vmul.f32 %v785, 1.442695
        %v787 = vpow.pop %v786
        %v788 = vsel %vm636, %v787, 0.0
        %789 = vadd.xlane.f32.xlu0 %v788
        %v790 = vpop.xlane.xlu0 %789
        %v791 = vrcp.pop %v790
        %v792 = vmul.f32 %v787, %v791
        %v793 = vpack.c.bf16 %v792, %v792
        %794 = vrot.lane.b32.xlu0 %v757, 48
        %v795 = vpop.permute.xlu0 %794
        %v797 = vsel %vm636, %v793, 0
        %v800 = vsel %vm673, %v795, 0
        %802 = vmatpush.bf16.msra.mxu0 0
        %803 = vmatpush.bf16.msra.mxu0 0
        %804 = vmatpush.bf16.msra.mxu0 0
        %805 = vmatpush.bf16.msra.mxu0 0
        %806 = vmatpush.bf16.msra.mxu0 0
        %807 = vmatpush.bf16.msra.mxu0 0
        %808 = vmatpush.bf16.msra.mxu0 0
        %809 = vmatpush.bf16.msra.mxu0 %v800
        %810 = vmatmul.bf16.gmra.mxu0 %v797
        %v811 = vpop.f32.mrf.mxu0
        %v812 = vadd.f32 0.0, %v811
        %v813 = vpop.f32.mrf.mxu0
        %814 = vdwg.mxu0
        %816 = vrot.lane.b32.xlu0 %v812, 16
        %v817 = vpop.permute.xlu0 %816
        %vm819 = vcmask 195712
        %820 = vst.msk [vmem:[#allocation3] sm:$0xff] %vm819, %v817
        %v821 = vld [vmem:[#allocation2] sm:$0xff]
        %v822 = vpack.c.bf16 %v821, %v821
        %824 = vrot.lane.b32.xlu0 %v822, 104
        %v825 = vpop.permute.xlu0 %824
        %826 = vrot.lane.b32.xlu0 %v822, 72
        %v827 = vpop.permute.xlu0 %826
        %v829 = vsel %vm636, %v825, 0
        %v832 = vsel %vm636, %v827, 0
        %834 = vmatpush.bf16.xpose.msra.mxu0 0
        %835 = vmatpush.bf16.xpose.msra.mxu0 0
        %836 = vmatpush.bf16.xpose.msra.mxu0 0
        %837 = vmatpush.bf16.xpose.msra.mxu0 0
        %838 = vmatpush.bf16.xpose.msra.mxu0 0
        %839 = vmatpush.bf16.xpose.msra.mxu0 0
        %840 = vmatpush.bf16.xpose.msra.mxu0 0
        %841 = vmatpush.bf16.xpose.msra.mxu0 %v832
        %842 = vmatmul.bf16.gmra.mxu0 %v829
        %v843 = vpop.f32.mrf.mxu0
        %v844 = vadd.f32 %v551, %v843
        %v845 = vpop.f32.mrf.mxu0
        %846 = vdwg.mxu0
        %v847 = vsel %vm636, %v844, -inf
        %848 = vmax.xlane.f32.xlu0 %v847
        %v849 = vpop.xlane.xlu0 %848
        %v850 = vsub.f32 %v844, %v849
        %v851 = vmul.f32 %v850, 1.442695
        %v852 = vpow.pop %v851
        %v853 = vsel %vm636, %v852, 0.0
        %854 = vadd.xlane.f32.xlu0 %v853
        %v855 = vpop.xlane.xlu0 %854
        %v856 = vrcp.pop %v855
        %v857 = vmul.f32 %v852, %v856
        %v858 = vpack.c.bf16 %v857, %v857
        %859 = vrot.lane.b32.xlu0 %v822, 40
        %v860 = vpop.permute.xlu0 %859
        %v862 = vsel %vm636, %v858, 0
        %v865 = vsel %vm673, %v860, 0
        %867 = vmatpush.bf16.msra.mxu0 0
        %868 = vmatpush.bf16.msra.mxu0 0
        %869 = vmatpush.bf16.msra.mxu0 0
        %870 = vmatpush.bf16.msra.mxu0 0
        %871 = vmatpush.bf16.msra.mxu0 0
        %872 = vmatpush.bf16.msra.mxu0 0
        %873 = vmatpush.bf16.msra.mxu0 0
        %874 = vmatpush.bf16.msra.mxu0 %v865
        %875 = vmatmul.bf16.gmra.mxu0 %v862
        %v876 = vpop.f32.mrf.mxu0
        %v877 = vadd.f32 0.0, %v876
        %v878 = vpop.f32.mrf.mxu0
        %879 = vdwg.mxu0
        %881 = vrot.lane.b32.xlu0 %v877, 24
        %v882 = vpop.permute.xlu0 %881
        %vm884 = vcmask 261312
        %885 = vst.msk [vmem:[#allocation3] sm:$0xff] %vm884, %v882
        %v886 = vld [vmem:[#allocation3] sm:$0xff]
        %v887 = vpack.c.bf16 %v886, %v886
        %v888 = vld [vmem:[%s5] sm:$0xf]
        %v889 = vld [vmem:[%s5 + $0x4] sm:$0xf]
        %v890 = vld [vmem:[%s5 + $0x8] sm:$0xf]
        %v891 = vld [vmem:[%s5 + $0xc] sm:$0xf]
        %v896 = vunpack.c.l.b16 %v888
        %v897 = vunpack.c.l.b16 %v889
        %v898 = vunpack.c.l.b16 %v890
        %v899 = vunpack.c.l.b16 %v891
        %v900 = vpack.c.b16 %v897, %v896
        %v901 = vpack.c.b16 %v899, %v898
        %v905 = vsel %vm554, %v887, 0
        %907 = vmatpush.bf16.msra.mxu0 0
        %908 = vmatpush.bf16.msra.mxu0 0
        %909 = vmatpush.bf16.msra.mxu0 0
        %910 = vmatpush.bf16.msra.mxu0 0
        %911 = vmatpush.bf16.msra.mxu0 0
        %912 = vmatpush.bf16.msra.mxu0 0
        %913 = vmatpush.bf16.msra.mxu0 %v901
        %914 = vmatpush.bf16.msra.mxu0 %v900
        %915 = vmatmul.bf16.gmra.mxu0 %v905
        %v916 = vpop.f32.mrf.mxu0
        %v917 = vadd.f32 0.0, %v916
        %v918 = vpop.f32.mrf.mxu0
        %919 = vdwg.mxu0
        %v920 = vadd.f32 %v545, %v917
        %v921 = vld [vmem:[%s6] sm:$0x1]
        %v923 = vperm.slane %v921, 0
        %v925 = vadd.f32 %v920, %v923
        %v926 = vld [vmem:[%s7] sm:$0x1]
        %v927 = vld [vmem:[%s8] sm:$0x1]
        %v928 = vsel %vm554, %v925, 0.0
        %929 = vadd.xlane.f32.xlu0 %v928
        %v930 = vpop.xlane.xlu0 %929
        %v931 = vmul.f32 %v930, %v564
        %v932 = vsub.f32 %v925, %v931
        %v933 = vmul.f32 %v932, %v932
        %v934 = vsel %vm554, %v933, 0.0
        %935 = vadd.xlane.f32.xlu0 %v934
        %v936 = vpop.xlane.xlu0 %935
        %v937 = vmul.f32 %v936, %v564
        %v938 = vadd.f32 %v937, 1e-05
        %v939 = vrsqrt.pop %v938
        %v940 = vmul.f32 %v939, %v938
        %v941 = vmul.f32 %v940, %v939
        %v942 = vmul.f32 0.5, %v941
        %v943 = vsub.f32 1.5, %v942
        %v944 = vmul.f32 %v939, %v943
        %vm945 = vweird.f32 %v938
        %vm946 = vweird.f32 %v939
        %vm947 = vmor %vm945, %vm946
        %v948 = vsel %vm947, %v939, %v944
        %v949 = vmul.f32 %v932, %v948
        %v951 = vperm.slane %v926, 0
        %v953 = vmul.f32 %v949, %v951
        %v955 = vperm.slane %v927, 0
        %v957 = vadd.f32 %v953, %v955
        %v958 = vpack.c.bf16 %v957, %v957
        %v959 = vld [vmem:[%s9] sm:$0xf]
        %v960 = vld [vmem:[%s9 + $0x4] sm:$0xf]
        %v961 = vld [vmem:[%s9 + $0x8] sm:$0xf]
        %v962 = vld [vmem:[%s9 + $0xc] sm:$0xf]
        %v963 = vld [vmem:[%s10] sm:$0x1]
        %v965 = vperm.slane %v963, 0
        %v971 = vunpack.c.l.b16 %v959
        %v972 = vunpack.c.l.b16 %v960
        %v973 = vunpack.c.l.b16 %v961
        %v974 = vunpack.c.l.b16 %v962
        %v975 = vpack.c.b16 %v972, %v971
        %v976 = vpack.c.b16 %v974, %v973
        %v980 = vsel %vm554, %v958, 0
        %982 = vmatpush.bf16.msra.mxu0 0
        %983 = vmatpush.bf16.msra.mxu0 0
        %984 = vmatpush.bf16.msra.mxu0 0
        %985 = vmatpush.bf16.msra.mxu0 0
        %986 = vmatpush.bf16.msra.mxu0 0
        %987 = vmatpush.bf16.msra.mxu0 0
        %988 = vmatpush.bf16.msra.mxu0 %v976
        %989 = vmatpush.bf16.msra.mxu0 %v975
        %990 = vmatmul.bf16.gmra.mxu0 %v980
        %v991 = vpop.f32.mrf.mxu0
        %v992 = vadd.f32 %v965, %v991
        %v993 = vpop.f32.mrf.mxu0
        %994 = vdwg.mxu0
        %v995 = vmax.f32 %v992, 0.0
        %v996 = vpack.c.bf16 %v995, %v995
        %v997 = vld [vmem:[%s11] sm:$0xf]
        %v998 = vld [vmem:[%s11 + $0x4] sm:$0xf]
        %v999 = vld [vmem:[%s11 + $0x8] sm:$0xf]
        %v1000 = vld [vmem:[%s11 + $0xc] sm:$0xf]
        %v1001 = vld [vmem:[%s11 + $0x10] sm:$0xf]
        %v1002 = vld [vmem:[%s11 + $0x14] sm:$0xf]
        %v1003 = vld [vmem:[%s11 + $0x18] sm:$0xf]
        %v1004 = vld [vmem:[%s11 + $0x1c] sm:$0xf]
        %v1005 = vld [vmem:[%s11 + $0x20] sm:$0xf]
        %v1006 = vld [vmem:[%s11 + $0x24] sm:$0xf]
        %v1007 = vld [vmem:[%s11 + $0x28] sm:$0xf]
        %v1008 = vld [vmem:[%s11 + $0x2c] sm:$0xf]
        %v1009 = vld [vmem:[%s11 + $0x30] sm:$0xf]
        %v1010 = vld [vmem:[%s11 + $0x34] sm:$0xf]
        %v1011 = vld [vmem:[%s11 + $0x38] sm:$0xf]
        %v1012 = vld [vmem:[%s11 + $0x3c] sm:$0xf]
        %v1029 = vunpack.c.l.b16 %v997
        %v1030 = vunpack.c.l.b16 %v998
        %v1031 = vunpack.c.l.b16 %v999
        %v1032 = vunpack.c.l.b16 %v1000
        %v1033 = vunpack.c.l.b16 %v1001
        %v1034 = vunpack.c.l.b16 %v1002
        %v1035 = vunpack.c.l.b16 %v1003
        %v1036 = vunpack.c.l.b16 %v1004
        %v1037 = vunpack.c.l.b16 %v1005
        %v1038 = vunpack.c.l.b16 %v1006
        %v1039 = vunpack.c.l.b16 %v1007
        %v1040 = vunpack.c.l.b16 %v1008
        %v1041 = vunpack.c.l.b16 %v1009
        %v1042 = vunpack.c.l.b16 %v1010
        %v1043 = vunpack.c.l.b16 %v1011
        %v1044 = vunpack.c.l.b16 %v1012
        %v1045 = vpack.c.b16 %v1030, %v1029
        %v1046 = vpack.c.b16 %v1032, %v1031
        %v1047 = vpack.c.b16 %v1034, %v1033
        %v1048 = vpack.c.b16 %v1036, %v1035
        %v1049 = vpack.c.b16 %v1038, %v1037
        %v1050 = vpack.c.b16 %v1040, %v1039
        %v1051 = vpack.c.b16 %v1042, %v1041
        %v1052 = vpack.c.b16 %v1044, %v1043
        %1061 = vmatpush.bf16.msra.mxu0 %v1052
        %1062 = vmatpush.bf16.msra.mxu0 %v1051
        %1063 = vmatpush.bf16.msra.mxu0 %v1050
        %1064 = vmatpush.bf16.msra.mxu0 %v1049
        %1065 = vmatpush.bf16.msra.mxu0 %v1048
        %1066 = vmatpush.bf16.msra.mxu0 %v1047
        %1067 = vmatpush.bf16.msra.mxu0 %v1046
        %1068 = vmatpush.bf16.msra.mxu0 %v1045
        %1069 = vmatmul.bf16.gmra.mxu0 %v996
        %v1070 = vpop.f32.mrf.mxu0
        %v1071 = vadd.f32 0.0, %v1070
        %v1072 = vpop.f32.mrf.mxu0
        %1073 = vdwg.mxu0
        %v1074 = vadd.f32 %v925, %v1071
        %v1075 = vld [vmem:[%s12] sm:$0x1]
        %v1077 = vperm.slane %v1075, 0
        %v1079 = vadd.f32 %v1074, %v1077
        %s1080 = scalar_lea.vmem %s1, 1
        %v1081 = vld [vmem:[%s1080] sm:$0x1]
        %s1082 = scalar_lea.vmem %s2, 1
        %v1083 = vld [vmem:[%s1082] sm:$0x1]
        %v1084 = vsel %vm554, %v1079, 0.0
        %1085 = vadd.xlane.f32.xlu0 %v1084
        %v1086 = vpop.xlane.xlu0 %1085
        %v1087 = vmul.f32 %v1086, %v564
        %v1088 = vsub.f32 %v1079, %v1087
        %v1089 = vmul.f32 %v1088, %v1088
        %v1090 = vsel %vm554, %v1089, 0.0
        %1091 = vadd.xlane.f32.xlu0 %v1090
        %v1092 = vpop.xlane.xlu0 %1091
        %v1093 = vmul.f32 %v1092, %v564
        %v1094 = vadd.f32 %v1093, 1e-05
        %v1095 = vrsqrt.pop %v1094
        %v1096 = vmul.f32 %v1095, %v1094
        %v1097 = vmul.f32 %v1096, %v1095
        %v1098 = vmul.f32 0.5, %v1097
        %v1099 = vsub.f32 1.5, %v1098
        %v1100 = vmul.f32 %v1095, %v1099
        %vm1101 = vweird.f32 %v1094
        %vm1102 = vweird.f32 %v1095
        %vm1103 = vmor %vm1101, %vm1102
        %v1104 = vsel %vm1103, %v1095, %v1100
        %v1105 = vmul.f32 %v1088, %v1104
        %v1107 = vperm.slane %v1081, 0
        %v1109 = vmul.f32 %v1105, %v1107
        %v1111 = vperm.slane %v1083, 0
        %v1113 = vadd.f32 %v1109, %v1111
        %v1114 = vpack.c.bf16 %v1113, %v1113
        %s1115 = scalar_lea.vmem %s3, 16
        %v1116 = vld [vmem:[%s1115] sm:$0xf]
        %v1117 = vld [vmem:[%s1115 + $0x4] sm:$0xf]
        %v1118 = vld [vmem:[%s1115 + $0x8] sm:$0xf]
        %v1119 = vld [vmem:[%s1115 + $0xc] sm:$0xf]
        %s1120 = scalar_lea.vmem %s4, 1
        %v1121 = vld [vmem:[%s1120] sm:$0x1]
        %v1123 = vperm.slane %v1121, 0
        %v1129 = vunpack.c.l.b16 %v1116
        %v1130 = vunpack.c.l.b16 %v1117
        %v1131 = vunpack.c.l.b16 %v1118
        %v1132 = vunpack.c.l.b16 %v1119
        %v1133 = vpack.c.b16 %v1130, %v1129
        %v1134 = vpack.c.b16 %v1132, %v1131
        %v1138 = vsel %vm554, %v1114, 0
        %1140 = vmatpush.bf16.msra.mxu0 0
        %1141 = vmatpush.bf16.msra.mxu0 0
        %1142 = vmatpush.bf16.msra.mxu0 0
        %1143 = vmatpush.bf16.msra.mxu0 0
        %1144 = vmatpush.bf16.msra.mxu0 0
        %1145 = vmatpush.bf16.msra.mxu0 0
        %1146 = vmatpush.bf16.msra.mxu0 %v1134
        %1147 = vmatpush.bf16.msra.mxu0 %v1133
        %1148 = vmatmul.bf16.gmra.mxu0 %v1138
        %v1149 = vpop.f32.mrf.mxu0
        %v1150 = vadd.f32 %v1123, %v1149
        %v1151 = vpop.f32.mrf.mxu0
        %1152 = vdwg.mxu0
        %1153 = vst.msk [vmem:[#allocation2] sm:$0xff] %vm629, %v1150
        %v1154 = vld [vmem:[#allocation2] sm:$0xff]
        %v1155 = vpack.c.bf16 %v1154, %v1154
        %1157 = vrot.lane.b32.xlu0 %v1155, 96
        %v1158 = vpop.permute.xlu0 %1157
        %v1160 = vsel %vm636, %v1155, 0
        %v1163 = vsel %vm636, %v1158, 0
        %1165 = vmatpush.bf16.xpose.msra.mxu0 0
        %1166 = vmatpush.bf16.xpose.msra.mxu0 0
        %1167 = vmatpush.bf16.xpose.msra.mxu0 0
        %1168 = vmatpush.bf16.xpose.msra.mxu0 0
        %1169 = vmatpush.bf16.xpose.msra.mxu0 0
        %1170 = vmatpush.bf16.xpose.msra.mxu0 0
        %1171 = vmatpush.bf16.xpose.msra.mxu0 0
        %1172 = vmatpush.bf16.xpose.msra.mxu0 %v1163
        %1173 = vmatmul.bf16.gmra.mxu0 %v1160
        %v1174 = vpop.f32.mrf.mxu0
        %v1175 = vadd.f32 %v551, %v1174
        %v1176 = vpop.f32.mrf.mxu0
        %1177 = vdwg.mxu0
        %v1178 = vsel %vm636, %v1175, -inf
        %1179 = vmax.xlane.f32.xlu0 %v1178
        %v1180 = vpop.xlane.xlu0 %1179
        %v1181 = vsub.f32 %v1175, %v1180
        %v1182 = vmul.f32 %v1181, 1.442695
        %v1183 = vpow.pop %v1182
        %v1184 = vsel %vm636, %v1183, 0.0
        %1185 = vadd.xlane.f32.xlu0 %v1184
        %v1186 = vpop.xlane.xlu0 %1185
        %v1187 = vrcp.pop %v1186
        %v1188 = vmul.f32 %v1183, %v1187
        %v1189 = vpack.c.bf16 %v1188, %v1188
        %1190 = vrot.lane.b32.xlu0 %v1155, 64
        %v1191 = vpop.permute.xlu0 %1190
        %v1193 = vsel %vm636, %v1189, 0
        %v1196 = vsel %vm673, %v1191, 0
        %1198 = vmatpush.bf16.msra.mxu0 0
        %1199 = vmatpush.bf16.msra.mxu0 0
        %1200 = vmatpush.bf16.msra.mxu0 0
        %1201 = vmatpush.bf16.msra.mxu0 0
        %1202 = vmatpush.bf16.msra.mxu0 0
        %1203 = vmatpush.bf16.msra.mxu0 0
        %1204 = vmatpush.bf16.msra.mxu0 0
        %1205 = vmatpush.bf16.msra.mxu0 %v1196
        %1206 = vmatmul.bf16.gmra.mxu0 %v1193
        %v1207 = vpop.f32.mrf.mxu0
        %v1208 = vadd.f32 0.0, %v1207
        %v1209 = vpop.f32.mrf.mxu0
        %1210 = vdwg.mxu0
        %1211 = vst.msk [vmem:[#allocation3] sm:$0xff] %vm636, %v1208
        %v1212 = vld [vmem:[#allocation2] sm:$0xff]
        %v1213 = vpack.c.bf16 %v1212, %v1212
        %1215 = vrot.lane.b32.xlu0 %v1213, 120
        %v1216 = vpop.permute.xlu0 %1215
        %1217 = vrot.lane.b32.xlu0 %v1213, 88
        %v1218 = vpop.permute.xlu0 %1217
        %v1220 = vsel %vm636, %v1216, 0
        %v1223 = vsel %vm636, %v1218, 0
        %1225 = vmatpush.bf16.xpose.msra.mxu0 0
        %1226 = vmatpush.bf16.xpose.msra.mxu0 0
        %1227 = vmatpush.bf16.xpose.msra.mxu0 0
        %1228 = vmatpush.bf16.xpose.msra.mxu0 0
        %1229 = vmatpush.bf16.xpose.msra.mxu0 0
        %1230 = vmatpush.bf16.xpose.msra.mxu0 0
        %1231 = vmatpush.bf16.xpose.msra.mxu0 0
        %1232 = vmatpush.bf16.xpose.msra.mxu0 %v1223
        %1233 = vmatmul.bf16.gmra.mxu0 %v1220
        %v1234 = vpop.f32.mrf.mxu0
        %v1235 = vadd.f32 %v551, %v1234
        %v1236 = vpop.f32.mrf.mxu0
        %1237 = vdwg.mxu0
        %v1238 = vsel %vm636, %v1235, -inf
        %1239 = vmax.xlane.f32.xlu0 %v1238
        %v1240 = vpop.xlane.xlu0 %1239
        %v1241 = vsub.f32 %v1235, %v1240
        %v1242 = vmul.f32 %v1241, 1.442695
        %v1243 = vpow.pop %v1242
        %v1244 = vsel %vm636, %v1243, 0.0
        %1245 = vadd.xlane.f32.xlu0 %v1244
        %v1246 = vpop.xlane.xlu0 %1245
        %v1247 = vrcp.pop %v1246
        %v1248 = vmul.f32 %v1243, %v1247
        %v1249 = vpack.c.bf16 %v1248, %v1248
        %1250 = vrot.lane.b32.xlu0 %v1213, 56
        %v1251 = vpop.permute.xlu0 %1250
        %v1253 = vsel %vm636, %v1249, 0
        %v1256 = vsel %vm673, %v1251, 0
        %1258 = vmatpush.bf16.msra.mxu0 0
        %1259 = vmatpush.bf16.msra.mxu0 0
        %1260 = vmatpush.bf16.msra.mxu0 0
        %1261 = vmatpush.bf16.msra.mxu0 0
        %1262 = vmatpush.bf16.msra.mxu0 0
        %1263 = vmatpush.bf16.msra.mxu0 0
        %1264 = vmatpush.bf16.msra.mxu0 0
        %1265 = vmatpush.bf16.msra.mxu0 %v1256
        %1266 = vmatmul.bf16.gmra.mxu0 %v1253
        %v1267 = vpop.f32.mrf.mxu0
        %v1268 = vadd.f32 0.0, %v1267
        %v1269 = vpop.f32.mrf.mxu0
        %1270 = vdwg.mxu0
        %1272 = vrot.lane.b32.xlu0 %v1268, 8
        %v1273 = vpop.permute.xlu0 %1272
        %1275 = vst.msk [vmem:[#allocation3] sm:$0xff] %vm754, %v1273
        %v1276 = vld [vmem:[#allocation2] sm:$0xff]
        %v1277 = vpack.c.bf16 %v1276, %v1276
        %1279 = vrot.lane.b32.xlu0 %v1277, 112
        %v1280 = vpop.permute.xlu0 %1279
        %1281 = vrot.lane.b32.xlu0 %v1277, 80
        %v1282 = vpop.permute.xlu0 %1281
        %v1284 = vsel %vm636, %v1280, 0
        %v1287 = vsel %vm636, %v1282, 0
        %1289 = vmatpush.bf16.xpose.msra.mxu0 0
        %1290 = vmatpush.bf16.xpose.msra.mxu0 0
        %1291 = vmatpush.bf16.xpose.msra.mxu0 0
        %1292 = vmatpush.bf16.xpose.msra.mxu0 0
        %1293 = vmatpush.bf16.xpose.msra.mxu0 0
        %1294 = vmatpush.bf16.xpose.msra.mxu0 0
        %1295 = vmatpush.bf16.xpose.msra.mxu0 0
        %1296 = vmatpush.bf16.xpose.msra.mxu0 %v1287
        %1297 = vmatmul.bf16.gmra.mxu0 %v1284
        %v1298 = vpop.f32.mrf.mxu0
        %v1299 = vadd.f32 %v551, %v1298
        %v1300 = vpop.f32.mrf.mxu0
        %1301 = vdwg.mxu0
        %v1302 = vsel %vm636, %v1299, -inf
        %1303 = vmax.xlane.f32.xlu0 %v1302
        %v1304 = vpop.xlane.xlu0 %1303
        %v1305 = vsub.f32 %v1299, %v1304
        %v1306 = vmul.f32 %v1305, 1.442695
        %v1307 = vpow.pop %v1306
        %v1308 = vsel %vm636, %v1307, 0.0
        %1309 = vadd.xlane.f32.xlu0 %v1308
        %v1310 = vpop.xlane.xlu0 %1309
        %v1311 = vrcp.pop %v1310
        %v1312 = vmul.f32 %v1307, %v1311
        %v1313 = vpack.c.bf16 %v1312, %v1312
        %1314 = vrot.lane.b32.xlu0 %v1277, 48
        %v1315 = vpop.permute.xlu0 %1314
        %v1317 = vsel %vm636, %v1313, 0
        %v1320 = vsel %vm673, %v1315, 0
        %1322 = vmatpush.bf16.msra.mxu0 0
        %1323 = vmatpush.bf16.msra.mxu0 0
        %1324 = vmatpush.bf16.msra.mxu0 0
        %1325 = vmatpush.bf16.msra.mxu0 0
        %1326 = vmatpush.bf16.msra.mxu0 0
        %1327 = vmatpush.bf16.msra.mxu0 0
        %1328 = vmatpush.bf16.msra.mxu0 0
        %1329 = vmatpush.bf16.msra.mxu0 %v1320
        %1330 = vmatmul.bf16.gmra.mxu0 %v1317
        %v1331 = vpop.f32.mrf.mxu0
        %v1332 = vadd.f32 0.0, %v1331
        %v1333 = vpop.f32.mrf.mxu0
        %1334 = vdwg.mxu0
        %1336 = vrot.lane.b32.xlu0 %v1332, 16
        %v1337 = vpop.permute.xlu0 %1336
        %1339 = vst.msk [vmem:[#allocation3] sm:$0xff] %vm819, %v1337
        %v1340 = vld [vmem:[#allocation2] sm:$0xff]
        %v1341 = vpack.c.bf16 %v1340, %v1340
        %1343 = vrot.lane.b32.xlu0 %v1341, 104
        %v1344 = vpop.permute.xlu0 %1343
        %1345 = vrot.lane.b32.xlu0 %v1341, 72
        %v1346 = vpop.permute.xlu0 %1345
        %v1348 = vsel %vm636, %v1344, 0
        %v1351 = vsel %vm636, %v1346, 0
        %1353 = vmatpush.bf16.xpose.msra.mxu0 0
        %1354 = vmatpush.bf16.xpose.msra.mxu0 0
        %1355 = vmatpush.bf16.xpose.msra.mxu0 0
        %1356 = vmatpush.bf16.xpose.msra.mxu0 0
        %1357 = vmatpush.bf16.xpose.msra.mxu0 0
        %1358 = vmatpush.bf16.xpose.msra.mxu0 0
        %1359 = vmatpush.bf16.xpose.msra.mxu0 0
        %1360 = vmatpush.bf16.xpose.msra.mxu0 %v1351
        %1361 = vmatmul.bf16.gmra.mxu0 %v1348
        %v1362 = vpop.f32.mrf.mxu0
        %v1363 = vadd.f32 %v551, %v1362
        %v1364 = vpop.f32.mrf.mxu0
        %1365 = vdwg.mxu0
        %v1366 = vsel %vm636, %v1363, -inf
        %1367 = vmax.xlane.f32.xlu0 %v1366
        %v1368 = vpop.xlane.xlu0 %1367
        %v1369 = vsub.f32 %v1363, %v1368
        %v1370 = vmul.f32 %v1369, 1.442695
        %v1371 = vpow.pop %v1370
        %v1372 = vsel %vm636, %v1371, 0.0
        %1373 = vadd.xlane.f32.xlu0 %v1372
        %v1374 = vpop.xlane.xlu0 %1373
        %v1375 = vrcp.pop %v1374
        %v1376 = vmul.f32 %v1371, %v1375
        %v1377 = vpack.c.bf16 %v1376, %v1376
        %1378 = vrot.lane.b32.xlu0 %v1341, 40
        %v1379 = vpop.permute.xlu0 %1378
        %v1381 = vsel %vm636, %v1377, 0
        %v1384 = vsel %vm673, %v1379, 0
        %1386 = vmatpush.bf16.msra.mxu0 0
        %1387 = vmatpush.bf16.msra.mxu0 0
        %1388 = vmatpush.bf16.msra.mxu0 0
        %1389 = vmatpush.bf16.msra.mxu0 0
        %1390 = vmatpush.bf16.msra.mxu0 0
        %1391 = vmatpush.bf16.msra.mxu0 0
        %1392 = vmatpush.bf16.msra.mxu0 0
        %1393 = vmatpush.bf16.msra.mxu0 %v1384
        %1394 = vmatmul.bf16.gmra.mxu0 %v1381
        %v1395 = vpop.f32.mrf.mxu0
        %v1396 = vadd.f32 0.0, %v1395
        %v1397 = vpop.f32.mrf.mxu0
        %1398 = vdwg.mxu0
        %1400 = vrot.lane.b32.xlu0 %v1396, 24
        %v1401 = vpop.permute.xlu0 %1400
        %1403 = vst.msk [vmem:[#allocation3] sm:$0xff] %vm884, %v1401
        %v1404 = vld [vmem:[#allocation3] sm:$0xff]
        %v1405 = vpack.c.bf16 %v1404, %v1404
        %s1406 = scalar_lea.vmem %s5, 16
        %v1407 = vld [vmem:[%s1406] sm:$0xf]
        %v1408 = vld [vmem:[%s1406 + $0x4] sm:$0xf]
        %v1409 = vld [vmem:[%s1406 + $0x8] sm:$0xf]
        %v1410 = vld [vmem:[%s1406 + $0xc] sm:$0xf]
        %v1415 = vunpack.c.l.b16 %v1407
        %v1416 = vunpack.c.l.b16 %v1408
        %v1417 = vunpack.c.l.b16 %v1409
        %v1418 = vunpack.c.l.b16 %v1410
        %v1419 = vpack.c.b16 %v1416, %v1415
        %v1420 = vpack.c.b16 %v1418, %v1417
        %v1424 = vsel %vm554, %v1405, 0
        %1426 = vmatpush.bf16.msra.mxu0 0
        %1427 = vmatpush.bf16.msra.mxu0 0
        %1428 = vmatpush.bf16.msra.mxu0 0
        %1429 = vmatpush.bf16.msra.mxu0 0
        %1430 = vmatpush.bf16.msra.mxu0 0
        %1431 = vmatpush.bf16.msra.mxu0 0
        %1432 = vmatpush.bf16.msra.mxu0 %v1420
        %1433 = vmatpush.bf16.msra.mxu0 %v1419
        %1434 = vmatmul.bf16.gmra.mxu0 %v1424
        %v1435 = vpop.f32.mrf.mxu0
        %v1436 = vadd.f32 0.0, %v1435
        %v1437 = vpop.f32.mrf.mxu0
        %1438 = vdwg.mxu0
        %v1439 = vadd.f32 %v1079, %v1436
        %s1440 = scalar_lea.vmem %s6, 1
        %v1441 = vld [vmem:[%s1440] sm:$0x1]
        %v1443 = vperm.slane %v1441, 0
        %v1445 = vadd.f32 %v1439, %v1443
        %s1446 = scalar_lea.vmem %s7, 1
        %v1447 = vld [vmem:[%s1446] sm:$0x1]
        %s1448 = scalar_lea.vmem %s8, 1
        %v1449 = vld [vmem:[%s1448] sm:$0x1]
        %v1450 = vsel %vm554, %v1445, 0.0
        %1451 = vadd.xlane.f32.xlu0 %v1450
        %v1452 = vpop.xlane.xlu0 %1451
        %v1453 = vmul.f32 %v1452, %v564
        %v1454 = vsub.f32 %v1445, %v1453
        %v1455 = vmul.f32 %v1454, %v1454
        %v1456 = vsel %vm554, %v1455, 0.0
        %1457 = vadd.xlane.f32.xlu0 %v1456
        %v1458 = vpop.xlane.xlu0 %1457
        %v1459 = vmul.f32 %v1458, %v564
        %v1460 = vadd.f32 %v1459, 1e-05
        %v1461 = vrsqrt.pop %v1460
        %v1462 = vmul.f32 %v1461, %v1460
        %v1463 = vmul.f32 %v1462, %v1461
        %v1464 = vmul.f32 0.5, %v1463
        %v1465 = vsub.f32 1.5, %v1464
        %v1466 = vmul.f32 %v1461, %v1465
        %vm1467 = vweird.f32 %v1460
        %vm1468 = vweird.f32 %v1461
        %vm1469 = vmor %vm1467, %vm1468
        %v1470 = vsel %vm1469, %v1461, %v1466
        %v1471 = vmul.f32 %v1454, %v1470
        %v1473 = vperm.slane %v1447, 0
        %v1475 = vmul.f32 %v1471, %v1473
        %v1477 = vperm.slane %v1449, 0
        %v1479 = vadd.f32 %v1475, %v1477
        %v1480 = vpack.c.bf16 %v1479, %v1479
        %s1481 = scalar_lea.vmem %s9, 16
        %v1482 = vld [vmem:[%s1481] sm:$0xf]
        %v1483 = vld [vmem:[%s1481 + $0x4] sm:$0xf]
        %v1484 = vld [vmem:[%s1481 + $0x8] sm:$0xf]
        %v1485 = vld [vmem:[%s1481 + $0xc] sm:$0xf]
        %s1486 = scalar_lea.vmem %s10, 1
        %v1487 = vld [vmem:[%s1486] sm:$0x1]
        %v1489 = vperm.slane %v1487, 0
        %v1495 = vunpack.c.l.b16 %v1482
        %v1496 = vunpack.c.l.b16 %v1483
        %v1497 = vunpack.c.l.b16 %v1484
        %v1498 = vunpack.c.l.b16 %v1485
        %v1499 = vpack.c.b16 %v1496, %v1495
        %v1500 = vpack.c.b16 %v1498, %v1497
        %v1504 = vsel %vm554, %v1480, 0
        %1506 = vmatpush.bf16.msra.mxu0 0
        %1507 = vmatpush.bf16.msra.mxu0 0
        %1508 = vmatpush.bf16.msra.mxu0 0
        %1509 = vmatpush.bf16.msra.mxu0 0
        %1510 = vmatpush.bf16.msra.mxu0 0
        %1511 = vmatpush.bf16.msra.mxu0 0
        %1512 = vmatpush.bf16.msra.mxu0 %v1500
        %1513 = vmatpush.bf16.msra.mxu0 %v1499
        %1514 = vmatmul.bf16.gmra.mxu0 %v1504
        %v1515 = vpop.f32.mrf.mxu0
        %v1516 = vadd.f32 %v1489, %v1515
        %v1517 = vpop.f32.mrf.mxu0
        %1518 = vdwg.mxu0
        %v1519 = vmax.f32 %v1516, 0.0
        %v1520 = vpack.c.bf16 %v1519, %v1519
        %s1521 = scalar_lea.vmem %s11, 64
        %v1522 = vld [vmem:[%s1521] sm:$0xf]
        %v1523 = vld [vmem:[%s1521 + $0x4] sm:$0xf]
        %v1524 = vld [vmem:[%s1521 + $0x8] sm:$0xf]
        %v1525 = vld [vmem:[%s1521 + $0xc] sm:$0xf]
        %v1526 = vld [vmem:[%s1521 + $0x10] sm:$0xf]
        %v1527 = vld [vmem:[%s1521 + $0x14] sm:$0xf]
        %v1528 = vld [vmem:[%s1521 + $0x18] sm:$0xf]
        %v1529 = vld [vmem:[%s1521 + $0x1c] sm:$0xf]
        %v1530 = vld [vmem:[%s1521 + $0x20] sm:$0xf]
        %v1531 = vld [vmem:[%s1521 + $0x24] sm:$0xf]
        %v1532 = vld [vmem:[%s1521 + $0x28] sm:$0xf]
        %v1533 = vld [vmem:[%s1521 + $0x2c] sm:$0xf]
        %v1534 = vld [vmem:[%s1521 + $0x30] sm:$0xf]
        %v1535 = vld [vmem:[%s1521 + $0x34] sm:$0xf]
        %v1536 = vld [vmem:[%s1521 + $0x38] sm:$0xf]
        %v1537 = vld [vmem:[%s1521 + $0x3c] sm:$0xf]
        %v1554 = vunpack.c.l.b16 %v1522
        %v1555 = vunpack.c.l.b16 %v1523
        %v1556 = vunpack.c.l.b16 %v1524
        %v1557 = vunpack.c.l.b16 %v1525
        %v1558 = vunpack.c.l.b16 %v1526
        %v1559 = vunpack.c.l.b16 %v1527
        %v1560 = vunpack.c.l.b16 %v1528
        %v1561 = vunpack.c.l.b16 %v1529
        %v1562 = vunpack.c.l.b16 %v1530
        %v1563 = vunpack.c.l.b16 %v1531
        %v1564 = vunpack.c.l.b16 %v1532
        %v1565 = vunpack.c.l.b16 %v1533
        %v1566 = vunpack.c.l.b16 %v1534
        %v1567 = vunpack.c.l.b16 %v1535
        %v1568 = vunpack.c.l.b16 %v1536
        %v1569 = vunpack.c.l.b16 %v1537
        %v1570 = vpack.c.b16 %v1555, %v1554
        %v1571 = vpack.c.b16 %v1557, %v1556
        %v1572 = vpack.c.b16 %v1559, %v1558
        %v1573 = vpack.c.b16 %v1561, %v1560
        %v1574 = vpack.c.b16 %v1563, %v1562
        %v1575 = vpack.c.b16 %v1565, %v1564
        %v1576 = vpack.c.b16 %v1567, %v1566
        %v1577 = vpack.c.b16 %v1569, %v1568
        %1586 = vmatpush.bf16.msra.mxu0 %v1577
        %1587 = vmatpush.bf16.msra.mxu0 %v1576
        %1588 = vmatpush.bf16.msra.mxu0 %v1575
        %1589 = vmatpush.bf16.msra.mxu0 %v1574
        %1590 = vmatpush.bf16.msra.mxu0 %v1573
        %1591 = vmatpush.bf16.msra.mxu0 %v1572
        %1592 = vmatpush.bf16.msra.mxu0 %v1571
        %1593 = vmatpush.bf16.msra.mxu0 %v1570
        %1594 = vmatmul.bf16.gmra.mxu0 %v1520
        %v1595 = vpop.f32.mrf.mxu0
        %v1596 = vadd.f32 0.0, %v1595
        %v1597 = vpop.f32.mrf.mxu0
        %1598 = vdwg.mxu0
        %v1599 = vadd.f32 %v1445, %v1596
        %s1600 = scalar_lea.vmem %s12, 1
        %v1601 = vld [vmem:[%s1600] sm:$0x1]
        %v1603 = vperm.slane %v1601, 0
        %v1605 = vadd.f32 %v1599, %v1603
        %v1606 = vld [vmem:[%s13] sm:$0x1]
        %v1607 = vld [vmem:[%s14] sm:$0x1]
        %v1608 = vsel %vm554, %v1605, 0.0
        %1609 = vadd.xlane.f32.xlu0 %v1608
        %v1610 = vpop.xlane.xlu0 %1609
        %v1611 = vmul.f32 %v1610, %v564
        %v1612 = vsub.f32 %v1605, %v1611
        %v1613 = vmul.f32 %v1612, %v1612
        %v1614 = vsel %vm554, %v1613, 0.0
        %1615 = vadd.xlane.f32.xlu0 %v1614
        %v1616 = vpop.xlane.xlu0 %1615
        %v1617 = vmul.f32 %v1616, %v564
        %v1618 = vadd.f32 %v1617, 1e-05
        %v1619 = vrsqrt.pop %v1618
        %v1620 = vmul.f32 %v1619, %v1618
        %v1621 = vmul.f32 %v1620, %v1619
        %v1622 = vmul.f32 0.5, %v1621
        %v1623 = vsub.f32 1.5, %v1622
        %v1624 = vmul.f32 %v1619, %v1623
        %vm1625 = vweird.f32 %v1618
        %vm1626 = vweird.f32 %v1619
        %vm1627 = vmor %vm1625, %vm1626
        %v1628 = vsel %vm1627, %v1619, %v1624
        %v1629 = vmul.f32 %v1612, %v1628
        %v1631 = vperm.slane %v1606, 0
        %v1633 = vmul.f32 %v1629, %v1631
        %v1635 = vperm.slane %v1607, 0
        %v1637 = vadd.f32 %v1633, %v1635
        %v1638 = vpack.c.bf16 %v1637, %v1637
        %v1639 = vld [vmem:[%s15] sm:$0xf]
        %v1640 = vld [vmem:[%s15 + $0x4] sm:$0xf]
        %v1641 = vld [vmem:[%s15 + $0x8] sm:$0xf]
        %v1642 = vld [vmem:[%s15 + $0xc] sm:$0xf]
        %v1643 = vld [vmem:[%s16] sm:$0x1]
        %v1645 = vperm.slane %v1643, 0
        %v1651 = vunpack.c.l.b16 %v1639
        %v1652 = vunpack.c.l.b16 %v1640
        %v1653 = vunpack.c.l.b16 %v1641
        %v1654 = vunpack.c.l.b16 %v1642
        %v1655 = vpack.c.b16 %v1652, %v1651
        %v1656 = vpack.c.b16 %v1654, %v1653
        %v1660 = vsel %vm554, %v1638, 0
        %1662 = vmatpush.bf16.msra.mxu0 0
        %1663 = vmatpush.bf16.msra.mxu0 0
        %1664 = vmatpush.bf16.msra.mxu0 0
        %1665 = vmatpush.bf16.msra.mxu0 0
        %1666 = vmatpush.bf16.msra.mxu0 0
        %1667 = vmatpush.bf16.msra.mxu0 0
        %1668 = vmatpush.bf16.msra.mxu0 %v1656
        %1669 = vmatpush.bf16.msra.mxu0 %v1655
        %1670 = vmatmul.bf16.gmra.mxu0 %v1660
        %v1671 = vpop.f32.mrf.mxu0
        %v1672 = vadd.f32 %v1645, %v1671
        %v1673 = vpop.f32.mrf.mxu0
        %1674 = vdwg.mxu0
        %1675 = vst [vmem:[%s539] sm:$0xff] %v1672
        %s1676 = sand.u32 %s401, 1
        %s1677 = scalar_lea.sflag [#allocation5], %s1676
        %s1678 = sand.u32 %s401, 1
        %s1679 = smul.addr %s1678, 8
        %s1680 = scalar_lea.vmem [#allocation4], %s1679
        // Predicated region
        $region89: #{transformer_forward.1} parent=87 // pred_check
          %p1681 = pneg %p411
        $region90: #{transformer_forward.1} parent=87 // pred_check_branch
          %1683 = sbr.rel (%p1681) target = $region92
        $region91: #{transformer_forward.1} parent=87 // pred_region
          %1685 = vsyncadd %s1677, 0
          %s1686 = smul.addr %s31, 8
          %s1687 = scalar_lea.hbm %s17, %s1686
          %s1689 = sshll.u32 %s1680, 4
          %s1690 = int_to_ptr.vmem [resolvable:$true] %s1689
          %s1691 = sshll.u32 %s1687, 4
          %s1692 = int_to_ptr.hbm [resolvable:$true] %s1691
          %1694 = dma.vmem_to_hbm [thread:$0]  %s1690, 128, %s1692, %s1677
        $region92: #{transformer_forward.1} parent=87 // pred_fallthru
          _
      $region88: #{transformer_forward.1} parent=5 // pred_fallthru
        _
      %p1695 = scmp.le.s32.totalorder 2, %s26
      // Predicated region
      $region93: #{transformer_forward.1} parent=5 // pred_check
        %p1696 = pneg %p1695
      $region94: #{transformer_forward.1} parent=5 // pred_check_branch
        %1698 = sbr.rel (%p1696) target = $region96
      $region95: #{transformer_forward.1} parent=5 // pred_region
        %s1699 = ssub.s32 %s26, 2
        // Predicated region
        $region97: #{transformer_forward.1} parent=95 // pred_check
          %p1700 = pneg %p417
        $region98: #{transformer_forward.1} parent=95 // pred_check_branch
          %1702 = sbr.rel (%p1700) target = $region100
        $region99: #{transformer_forward.1} parent=95 // pred_region
          %s1703 = sand.u32 %s402, 1
          %s1704 = scalar_lea.sflag [#allocation5], %s1703
          %s1705 = sand.u32 %s402, 1
          %s1706 = smul.addr %s1705, 8
          %s1707 = scalar_lea.vmem [#allocation4], %s1706
          %1709 = dma.done %s1704, 128
        $region100: #{transformer_forward.1} parent=95 // pred_fallthru
          _
      $region96: #{transformer_forward.1} parent=5 // pred_fallthru
        _
    $region6: #{transformer_forward.1} parent=1 // loop_footer
      %s30 = sadd.s32 1, %s26
    $region7: #{transformer_forward.1} parent=1 // loop_footer_branch
      %25 = sbr.rel target = $region3
    $region8: #{transformer_forward.1} parent=1 // loop_exit
      _
    %1710 = vsyncpa [#allocation5], 1
    %s1711 = scalar_lea.sflag [#allocation5], 1
    %1712 = vsyncpa %s1711, 1

</llo_original>
